<compile_context>
chip_gen: v7x
topology: tpu7x:2x2x1
jax: 0.10.0
libtpu: 0.0.40
codegen_flags: <defaults>
</compile_context>

<pallas_src>
import functools

import jax
import jax.numpy as jnp
from jax.experimental import pallas as pl
from jax.experimental.pallas import tpu as pltpu


def _gru_recurrent_kernel(gi_ref, whh_ref, bhh_ref, out_ref, state_ref,
                          h_scratch, *, chunk, unroll):
    """One grid step = `chunk` GRU time steps (recurrent half only).

    gi_ref   : (chunk, 3, B, H) precomputed input projection (gate-major: r, z, n)
    whh_ref  : (3, H, H)        recurrent weights, already transposed per gate (h @ W)
    bhh_ref  : (3, 1, H)        recurrent biases
    out_ref  : (chunk, B, H)    per-step hidden outputs
    state_ref: (1, B, H)        final hidden state (written once, on last chunk)
    h_scratch: (B, H) f32       carried hidden state across grid steps
    """
    c = pl.program_id(0)

    @pl.when(c == 0)
    def _():
        # hidden=None in the PyTorch forward -> zero initial state
        h_scratch[...] = jnp.zeros_like(h_scratch)

    # Loop-invariant recurrent weights/biases, hoisted out of the time loop.
    whh_r = whh_ref[0]
    whh_z = whh_ref[1]
    whh_n = whh_ref[2]
    bhh_r = bhh_ref[0]
    bhh_z = bhh_ref[1]
    bhh_n = bhh_ref[2]

    def step(s, carry):
        h_prev = h_scratch[...]                       # (B, H) f32
        gi_t = gi_ref[s]                              # (3, B, H): i_r, i_z, i_n

        gh_r = jnp.dot(h_prev, whh_r, preferred_element_type=jnp.float32) + bhh_r
        gh_z = jnp.dot(h_prev, whh_z, preferred_element_type=jnp.float32) + bhh_z
        gh_n = jnp.dot(h_prev, whh_n, preferred_element_type=jnp.float32) + bhh_n

        r = jax.nn.sigmoid(gi_t[0] + gh_r)
        z = jax.nn.sigmoid(gi_t[1] + gh_z)
        n = jnp.tanh(gi_t[2] + r * gh_n)
        h_new = (1.0 - z) * n + z * h_prev

        h_scratch[...] = h_new
        out_ref[s] = h_new.astype(out_ref.dtype)
        return carry

    jax.lax.fori_loop(0, chunk, step, 0, unroll=unroll)

    @pl.when(c == pl.num_programs(0) - 1)
    def _():
        state_ref[0] = h_scratch[...].astype(state_ref.dtype)


def _pick_chunk(T, max_chunk=128):
    c = min(T, max_chunk)
    while T % c != 0:
        c -= 1
    return c


def gru_encoder_pallas(gi_t3bh, w_hh_t3, b_hh_3, *, chunk=None):
    """gi_t3bh: (T, 3, B, H) f32; w_hh_t3: (3, H, H); b_hh_3: (3, 1, H)."""
    T, three, B, H = gi_t3bh.shape
    assert three == 3
    if chunk is None:
        chunk = _pick_chunk(T)
    num_chunks = T // chunk
    unroll = True if chunk <= 32 else 8

    kernel = functools.partial(_gru_recurrent_kernel, chunk=chunk, unroll=unroll)

    out_tbh, state_1bh = pl.pallas_call(
        kernel,
        out_shape=(
            jax.ShapeDtypeStruct((T, B, H), jnp.float32),   # per-step outputs (time-major)
            jax.ShapeDtypeStruct((1, B, H), jnp.float32),   # final state (num_layers=1)
        ),
        grid_spec=pltpu.PrefetchScalarGridSpec(
            num_scalar_prefetch=0,
            grid=(num_chunks,),
            in_specs=[
                pl.BlockSpec((chunk, 3, B, H), lambda c: (c, 0, 0, 0)),  # GI chunk
                pl.BlockSpec((3, H, H), lambda c: (0, 0, 0)),            # W_hh^T (per gate)
                pl.BlockSpec((3, 1, H), lambda c: (0, 0, 0)),            # b_hh (per gate)
            ],
            out_specs=[
                pl.BlockSpec((chunk, B, H), lambda c: (c, 0, 0)),        # output chunk
                pl.BlockSpec((1, B, H), lambda c: (0, 0, 0)),            # resident final state
            ],
            scratch_shapes=[pltpu.VMEM((B, H), jnp.float32)],            # carried hidden state
        ),
        compiler_params=pltpu.CompilerParams(
            dimension_semantics=("arbitrary",),   # time recurrence: sequential
        ),
    )(gi_t3bh, w_hh_t3, b_hh_3)
    return out_tbh, state_1bh


def encoder_forward(tokens, params, *, chunk=None):
    """tokens: (B, T) int32. Returns (output (B,T,H), state (1,B,H)) like the PyTorch module."""
    emb = params["embedding"]                   # (vocab, E)
    w_ih = params["w_ih"]                       # (3H, E) torch layout, gates [r, z, n]
    b_ih = params["b_ih"]                       # (3H,)
    w_hh_t3 = params["w_hh_t3"]                 # (3, H, H)
    b_hh_3 = params["b_hh_3"]                   # (3, 1, H)
    H = w_hh_t3.shape[-1]
    E = emb.shape[1]

    x_emb = jnp.take(emb, tokens, axis=0)       # (B, T, E)  -- gather glue in plain JAX

    # Hoisted input projection: one large batched matmul over all T*B rows (fully parallel,
    # MXU-friendly), written directly in gate-major / time-major layout (T, 3, B, H).
    w_ih_3 = w_ih.reshape(3, H, E)
    b_ih_3 = b_ih.reshape(3, H)
    gi = jnp.einsum("bte,ghe->tgbh", x_emb, w_ih_3) + b_ih_3[None, :, None, :]

    out_tbh, state = gru_encoder_pallas(gi, w_hh_t3, b_hh_3, chunk=chunk)
    output = jnp.transpose(out_tbh, (1, 0, 2))  # (B, T, H) batch_first
    return output, state


def init_params(key, vocab_size, embedding_dim, enc_units):
    k1, k2, k3, k4, k5 = jax.random.split(key, 5)
    H, E = enc_units, embedding_dim
    bound = 1.0 / jnp.sqrt(H)
    emb = jax.random.normal(k1, (vocab_size, E), jnp.float32)
    # PyTorch stores weight_ih_l0 as (3H, E), weight_hh_l0 as (3H, H), gate order [r, z, n].
    w_ih = jax.random.uniform(k2, (3 * H, E), jnp.float32, -bound, bound)
    w_hh = jax.random.uniform(k3, (3 * H, H), jnp.float32, -bound, bound)
    b_ih = jax.random.uniform(k4, (3 * H,), jnp.float32, -bound, bound)
    b_hh = jax.random.uniform(k5, (3 * H,), jnp.float32, -bound, bound)
    return {
        "embedding": emb,
        "w_ih": w_ih,                                               # (3H, E)
        "b_ih": b_ih,                                               # (3H,)
        "w_hh_t3": jnp.transpose(w_hh.reshape(3, H, H), (0, 2, 1)),  # (3, H_in, H_out)
        "b_hh_3": b_hh.reshape(3, 1, H),                             # (3, 1, H)
    }


def _reference_forward(tokens, params):
    """Pure-JAX reference (lax.scan) replicating torch.nn.GRU math."""
    emb = jnp.take(params["embedding"], tokens, axis=0)       # (B, T, E)
    x_tbe = jnp.transpose(emb, (1, 0, 2))
    H = params["w_hh_t3"].shape[-1]
    w_ih_t = params["w_ih"].T                                 # (E, 3H)
    b_ih = params["b_ih"]
    w_hh_t3 = params["w_hh_t3"]
    b_hh_3 = params["b_hh_3"]

    def step(h, x_t):
        gi = x_t @ w_ih_t + b_ih
        i_r, i_z, i_n = gi[:, :H], gi[:, H:2 * H], gi[:, 2 * H:]
        h_r = h @ w_hh_t3[0] + b_hh_3[0]
        h_z = h @ w_hh_t3[1] + b_hh_3[1]
        h_n = h @ w_hh_t3[2] + b_hh_3[2]
        r = jax.nn.sigmoid(i_r + h_r)
        z = jax.nn.sigmoid(i_z + h_z)
        n = jnp.tanh(i_n + r * h_n)
        h_new = (1.0 - z) * n + z * h
        return h_new, h_new

    B = tokens.shape[0]
    h0 = jnp.zeros((B, H), jnp.float32)
    h_last, out_tbh = jax.lax.scan(step, h0, x_tbe)
    return jnp.transpose(out_tbh, (1, 0, 2)), h_last[None]


if __name__ == "__main__":
    # small shapes consistent with the module's forward
    batch, seq_len = 4, 8
    vocab_size, embedding_dim, enc_units = 128, 32, 32

    key = jax.random.PRNGKey(0)
    kp, kt = jax.random.split(key)
    params = init_params(kp, vocab_size, embedding_dim, enc_units)
    tokens = jax.random.randint(kt, (batch, seq_len), 0, vocab_size, dtype=jnp.int32)

    output, state = jax.jit(encoder_forward)(tokens, params)
    jax.block_until_ready((output, state))

    ref_out, ref_state = _reference_forward(tokens, params)
    assert output.shape == (batch, seq_len, enc_units)
    assert state.shape == (1, batch, enc_units)
    assert jnp.allclose(output, ref_out, atol=1e-5, rtol=1e-5)
    assert jnp.allclose(state, ref_state, atol=1e-5, rtol=1e-5)

    print("KERNEL_OK")
</pallas_src>

<mosaic_0001>
module attributes {stable_mosaic.version = 11 : i64} {
  func.func @_gru_recurrent_kernel(%arg0: i32, %arg1: memref<8x3x4x32xf32, #tpu.memory_space<vmem>>, %arg2: memref<3x32x32xf32, #tpu.memory_space<vmem>>, %arg3: memref<3x1x32xf32, #tpu.memory_space<vmem>>, %arg4: memref<8x4x32xf32, #tpu.memory_space<vmem>>, %arg5: memref<1x4x32xf32, #tpu.memory_space<vmem>>, %arg6: memref<4x32xf32, #tpu.memory_space<vmem>>) attributes {dimension_semantics = [#tpu.dimension_semantics<arbitrary>], iteration_bounds = array<i64: 1>, scalar_prefetch = 0 : i64, scratch_operands = 1 : i64, tpu.core_type = #tpu.core_type<tc>, window_params = [{transform_indices = @transform_0, window_bounds = array<i64: 8, 3, 4, 32>}, {pipeline_mode = #tpu.pipeline_mode<synchronous>, transform_indices = @transform_1, window_bounds = array<i64: 3, 32, 32>}, {pipeline_mode = #tpu.pipeline_mode<synchronous>, transform_indices = @transform_2, window_bounds = array<i64: 3, 1, 32>}, {transform_indices = @transform_3, window_bounds = array<i64: 8, 4, 32>}, {pipeline_mode = #tpu.pipeline_mode<synchronous>, transform_indices = @transform_4, window_bounds = array<i64: 1, 4, 32>}]} {
    %c0_i32 = arith.constant 0 : i32
    %0 = arith.cmpi eq, %arg0, %c0_i32 : i32
    %1 = arith.extui %0 : i1 to i32
    %c0_i32_0 = arith.constant 0 : i32
    %2 = arith.cmpi ne, %1, %c0_i32_0 : i32
    scf.if %2 {
      %cst_138 = arith.constant 0.000000e+00 : f32
      %370 = vector.broadcast %cst_138 : f32 to vector<4x32xf32>
      %c0_139 = arith.constant 0 : index
      %c0_140 = arith.constant 0 : index
      %371 = vector.load %arg6[%c0_139, %c0_140] : memref<4x32xf32, #tpu.memory_space<vmem>>, vector<4x32xf32>
      tpu.vector_store %arg6[%c0_139, %c0_140], %370 {strides = array<i32>} : memref<4x32xf32, #tpu.memory_space<vmem>>, vector<4x32xf32>,
    } else {
    }
    %c0 = arith.constant 0 : index
    %c0_1 = arith.constant 0 : index
    %c0_2 = arith.constant 0 : index
    %3 = vector.load %arg2[%c0, %c0_1, %c0_2] : memref<3x32x32xf32, #tpu.memory_space<vmem>>, vector<1x32x32xf32>
    %4 = vector.shape_cast %3 : vector<1x32x32xf32> to vector<32x32xf32>
    %c1 = arith.constant 1 : index
    %c0_3 = arith.constant 0 : index
    %c0_4 = arith.constant 0 : index
    %5 = vector.load %arg2[%c1, %c0_3, %c0_4] : memref<3x32x32xf32, #tpu.memory_space<vmem>>, vector<1x32x32xf32>
    %6 = vector.shape_cast %5 : vector<1x32x32xf32> to vector<32x32xf32>
    %c2 = arith.constant 2 : index
    %c0_5 = arith.constant 0 : index
    %c0_6 = arith.constant 0 : index
    %7 = vector.load %arg2[%c2, %c0_5, %c0_6] : memref<3x32x32xf32, #tpu.memory_space<vmem>>, vector<1x32x32xf32>
    %8 = vector.shape_cast %7 : vector<1x32x32xf32> to vector<32x32xf32>
    %c0_7 = arith.constant 0 : index
    %c0_8 = arith.constant 0 : index
    %c0_9 = arith.constant 0 : index
    %9 = vector.load %arg3[%c0_7, %c0_8, %c0_9] : memref<3x1x32xf32, #tpu.memory_space<vmem>>, vector<1x1x32xf32>
    %10 = vector.shape_cast %9 : vector<1x1x32xf32> to vector<1x32xf32>
    %c1_10 = arith.constant 1 : index
    %c0_11 = arith.constant 0 : index
    %c0_12 = arith.constant 0 : index
    %11 = vector.load %arg3[%c1_10, %c0_11, %c0_12] : memref<3x1x32xf32, #tpu.memory_space<vmem>>, vector<1x1x32xf32>
    %12 = vector.shape_cast %11 : vector<1x1x32xf32> to vector<1x32xf32>
    %c2_13 = arith.constant 2 : index
    %c0_14 = arith.constant 0 : index
    %c0_15 = arith.constant 0 : index
    %13 = vector.load %arg3[%c2_13, %c0_14, %c0_15] : memref<3x1x32xf32, #tpu.memory_space<vmem>>, vector<1x1x32xf32>
    %14 = vector.shape_cast %13 : vector<1x1x32xf32> to vector<1x32xf32>
    %c0_i32_16 = arith.constant 0 : i32
    %c0_17 = arith.constant 0 : index
    %c0_18 = arith.constant 0 : index
    %15 = vector.load %arg6[%c0_17, %c0_18] : memref<4x32xf32, #tpu.memory_space<vmem>>, vector<4x32xf32>
    %16 = arith.index_cast %c0_i32_16 : i32 to index
    %c0_19 = arith.constant 0 : index
    %c0_20 = arith.constant 0 : index
    %c0_21 = arith.constant 0 : index
    %17 = vector.load %arg1[%16, %c0_19, %c0_20, %c0_21] : memref<8x3x4x32xf32, #tpu.memory_space<vmem>>, vector<1x3x4x32xf32>
    %18 = vector.shape_cast %17 : vector<1x3x4x32xf32> to vector<3x4x32xf32>
    %cst = arith.constant dense<0.000000e+00> : vector<4x32xf32>
    %19 = tpu.matmul %15, %4, %cst {dimension_numbers = #tpu.dot_dimension_numbers<[1], [0], [0], [1], [0, 0, 1, 1], [], []>} : vector<4x32xf32>, vector<32x32xf32>, vector<4x32xf32> -> vector<4x32xf32>
    %20 = vector.broadcast %10 : vector<1x32xf32> to vector<4x32xf32>
    %21 = arith.addf %19, %20 : vector<4x32xf32>
    %cst_22 = arith.constant dense<0.000000e+00> : vector<4x32xf32>
    %22 = tpu.matmul %15, %6, %cst_22 {dimension_numbers = #tpu.dot_dimension_numbers<[1], [0], [0], [1], [0, 0, 1, 1], [], []>} : vector<4x32xf32>, vector<32x32xf32>, vector<4x32xf32> -> vector<4x32xf32>
    %23 = vector.broadcast %12 : vector<1x32xf32> to vector<4x32xf32>
    %24 = arith.addf %22, %23 : vector<4x32xf32>
    %cst_23 = arith.constant dense<0.000000e+00> : vector<4x32xf32>
    %25 = tpu.matmul %15, %8, %cst_23 {dimension_numbers = #tpu.dot_dimension_numbers<[1], [0], [0], [1], [0, 0, 1, 1], [], []>} : vector<4x32xf32>, vector<32x32xf32>, vector<4x32xf32> -> vector<4x32xf32>
    %26 = vector.broadcast %14 : vector<1x32xf32> to vector<4x32xf32>
    %27 = arith.addf %25, %26 : vector<4x32xf32>
    %28 = vector.extract_strided_slice %18 {offsets = [0, 0, 0], sizes = [1, 4, 32], strides = [1, 1, 1]} : vector<3x4x32xf32> to vector<1x4x32xf32>
    %29 = vector.shape_cast %28 : vector<1x4x32xf32> to vector<4x32xf32>
    %30 = arith.addf %29, %21 : vector<4x32xf32>
    %31 = arith.negf %30 : vector<4x32xf32>
    %32 = math.exp %31 : vector<4x32xf32>
    %cst_24 = arith.constant 1.000000e+00 : f32
    %33 = vector.broadcast %cst_24 : f32 to vector<4x32xf32>
    %34 = arith.addf %33, %32 : vector<4x32xf32>
    %35 = arith.divf %33, %34 : vector<4x32xf32>
    %36 = vector.extract_strided_slice %18 {offsets = [1, 0, 0], sizes = [1, 4, 32], strides = [1, 1, 1]} : vector<3x4x32xf32> to vector<1x4x32xf32>
    %37 = vector.shape_cast %36 : vector<1x4x32xf32> to vector<4x32xf32>
    %38 = arith.addf %37, %24 : vector<4x32xf32>
    %39 = arith.negf %38 : vector<4x32xf32>
    %40 = math.exp %39 : vector<4x32xf32>
    %cst_25 = arith.constant 1.000000e+00 : f32
    %41 = vector.broadcast %cst_25 : f32 to vector<4x32xf32>
    %42 = arith.addf %41, %40 : vector<4x32xf32>
    %43 = arith.divf %41, %42 : vector<4x32xf32>
    %44 = vector.extract_strided_slice %18 {offsets = [2, 0, 0], sizes = [1, 4, 32], strides = [1, 1, 1]} : vector<3x4x32xf32> to vector<1x4x32xf32>
    %45 = vector.shape_cast %44 : vector<1x4x32xf32> to vector<4x32xf32>
    %46 = arith.mulf %35, %27 : vector<4x32xf32>
    %47 = arith.addf %45, %46 : vector<4x32xf32>
    %48 = math.tanh %47 : vector<4x32xf32>
    %cst_26 = arith.constant 1.000000e+00 : f32
    %49 = vector.broadcast %cst_26 : f32 to vector<4x32xf32>
    %50 = arith.subf %49, %43 : vector<4x32xf32>
    %51 = arith.mulf %50, %48 : vector<4x32xf32>
    %52 = arith.mulf %43, %15 : vector<4x32xf32>
    %53 = arith.addf %51, %52 : vector<4x32xf32>
    %c0_27 = arith.constant 0 : index
    %c0_28 = arith.constant 0 : index
    %54 = vector.load %arg6[%c0_27, %c0_28] : memref<4x32xf32, #tpu.memory_space<vmem>>, vector<4x32xf32>
    tpu.vector_store %arg6[%c0_27, %c0_28], %53 {strides = array<i32>} : memref<4x32xf32, #tpu.memory_space<vmem>>, vector<4x32xf32>,
    %55 = arith.index_cast %c0_i32_16 : i32 to index
    %c0_29 = arith.constant 0 : index
    %c0_30 = arith.constant 0 : index
    %56 = vector.load %arg4[%55, %c0_29, %c0_30] : memref<8x4x32xf32, #tpu.memory_space<vmem>>, vector<1x4x32xf32>
    %57 = vector.shape_cast %56 : vector<1x4x32xf32> to vector<4x32xf32>
    %58 = vector.shape_cast %53 : vector<4x32xf32> to vector<1x4x32xf32>
    tpu.vector_store %arg4[%55, %c0_29, %c0_30], %58 {strides = array<i32>} : memref<8x4x32xf32, #tpu.memory_space<vmem>>, vector<1x4x32xf32>,
    %c1_i32 = arith.constant 1 : i32
    %c0_31 = arith.constant 0 : index
    %c0_32 = arith.constant 0 : index
    %59 = vector.load %arg6[%c0_31, %c0_32] : memref<4x32xf32, #tpu.memory_space<vmem>>, vector<4x32xf32>
    %60 = arith.index_cast %c1_i32 : i32 to index
    %c0_33 = arith.constant 0 : index
    %c0_34 = arith.constant 0 : index
    %c0_35 = arith.constant 0 : index
    %61 = vector.load %arg1[%60, %c0_33, %c0_34, %c0_35] : memref<8x3x4x32xf32, #tpu.memory_space<vmem>>, vector<1x3x4x32xf32>
    %62 = vector.shape_cast %61 : vector<1x3x4x32xf32> to vector<3x4x32xf32>
    %cst_36 = arith.constant dense<0.000000e+00> : vector<4x32xf32>
    %63 = tpu.matmul %59, %4, %cst_36 {dimension_numbers = #tpu.dot_dimension_numbers<[1], [0], [0], [1], [0, 0, 1, 1], [], []>} : vector<4x32xf32>, vector<32x32xf32>, vector<4x32xf32> -> vector<4x32xf32>
    %64 = vector.broadcast %10 : vector<1x32xf32> to vector<4x32xf32>
    %65 = arith.addf %63, %64 : vector<4x32xf32>
    %cst_37 = arith.constant dense<0.000000e+00> : vector<4x32xf32>
    %66 = tpu.matmul %59, %6, %cst_37 {dimension_numbers = #tpu.dot_dimension_numbers<[1], [0], [0], [1], [0, 0, 1, 1], [], []>} : vector<4x32xf32>, vector<32x32xf32>, vector<4x32xf32> -> vector<4x32xf32>
    %67 = vector.broadcast %12 : vector<1x32xf32> to vector<4x32xf32>
    %68 = arith.addf %66, %67 : vector<4x32xf32>
    %cst_38 = arith.constant dense<0.000000e+00> : vector<4x32xf32>
    %69 = tpu.matmul %59, %8, %cst_38 {dimension_numbers = #tpu.dot_dimension_numbers<[1], [0], [0], [1], [0, 0, 1, 1], [], []>} : vector<4x32xf32>, vector<32x32xf32>, vector<4x32xf32> -> vector<4x32xf32>
    %70 = vector.broadcast %14 : vector<1x32xf32> to vector<4x32xf32>
    %71 = arith.addf %69, %70 : vector<4x32xf32>
    %72 = vector.extract_strided_slice %62 {offsets = [0, 0, 0], sizes = [1, 4, 32], strides = [1, 1, 1]} : vector<3x4x32xf32> to vector<1x4x32xf32>
    %73 = vector.shape_cast %72 : vector<1x4x32xf32> to vector<4x32xf32>
    %74 = arith.addf %73, %65 : vector<4x32xf32>
    %75 = arith.negf %74 : vector<4x32xf32>
    %76 = math.exp %75 : vector<4x32xf32>
    %cst_39 = arith.constant 1.000000e+00 : f32
    %77 = vector.broadcast %cst_39 : f32 to vector<4x32xf32>
    %78 = arith.addf %77, %76 : vector<4x32xf32>
    %79 = arith.divf %77, %78 : vector<4x32xf32>
    %80 = vector.extract_strided_slice %62 {offsets = [1, 0, 0], sizes = [1, 4, 32], strides = [1, 1, 1]} : vector<3x4x32xf32> to vector<1x4x32xf32>
    %81 = vector.shape_cast %80 : vector<1x4x32xf32> to vector<4x32xf32>
    %82 = arith.addf %81, %68 : vector<4x32xf32>
    %83 = arith.negf %82 : vector<4x32xf32>
    %84 = math.exp %83 : vector<4x32xf32>
    %cst_40 = arith.constant 1.000000e+00 : f32
    %85 = vector.broadcast %cst_40 : f32 to vector<4x32xf32>
    %86 = arith.addf %85, %84 : vector<4x32xf32>
    %87 = arith.divf %85, %86 : vector<4x32xf32>
    %88 = vector.extract_strided_slice %62 {offsets = [2, 0, 0], sizes = [1, 4, 32], strides = [1, 1, 1]} : vector<3x4x32xf32> to vector<1x4x32xf32>
    %89 = vector.shape_cast %88 : vector<1x4x32xf32> to vector<4x32xf32>
    %90 = arith.mulf %79, %71 : vector<4x32xf32>
    %91 = arith.addf %89, %90 : vector<4x32xf32>
    %92 = math.tanh %91 : vector<4x32xf32>
    %cst_41 = arith.constant 1.000000e+00 : f32
    %93 = vector.broadcast %cst_41 : f32 to vector<4x32xf32>
    %94 = arith.subf %93, %87 : vector<4x32xf32>
    %95 = arith.mulf %94, %92 : vector<4x32xf32>
    %96 = arith.mulf %87, %59 : vector<4x32xf32>
    %97 = arith.addf %95, %96 : vector<4x32xf32>
    %c0_42 = arith.constant 0 : index
    %c0_43 = arith.constant 0 : index
    %98 = vector.load %arg6[%c0_42, %c0_43] : memref<4x32xf32, #tpu.memory_space<vmem>>, vector<4x32xf32>
    tpu.vector_store %arg6[%c0_42, %c0_43], %97 {strides = array<i32>} : memref<4x32xf32, #tpu.memory_space<vmem>>, vector<4x32xf32>,
    %99 = arith.index_cast %c1_i32 : i32 to index
    %c0_44 = arith.constant 0 : index
    %c0_45 = arith.constant 0 : index
    %100 = vector.load %arg4[%99, %c0_44, %c0_45] : memref<8x4x32xf32, #tpu.memory_space<vmem>>, vector<1x4x32xf32>
    %101 = vector.shape_cast %100 : vector<1x4x32xf32> to vector<4x32xf32>
    %102 = vector.shape_cast %97 : vector<4x32xf32> to vector<1x4x32xf32>
    tpu.vector_store %arg4[%99, %c0_44, %c0_45], %102 {strides = array<i32>} : memref<8x4x32xf32, #tpu.memory_space<vmem>>, vector<1x4x32xf32>,
    %c2_i32 = arith.constant 2 : i32
    %c0_46 = arith.constant 0 : index
    %c0_47 = arith.constant 0 : index
    %103 = vector.load %arg6[%c0_46, %c0_47] : memref<4x32xf32, #tpu.memory_space<vmem>>, vector<4x32xf32>
    %104 = arith.index_cast %c2_i32 : i32 to index
    %c0_48 = arith.constant 0 : index
    %c0_49 = arith.constant 0 : index
    %c0_50 = arith.constant 0 : index
    %105 = vector.load %arg1[%104, %c0_48, %c0_49, %c0_50] : memref<8x3x4x32xf32, #tpu.memory_space<vmem>>, vector<1x3x4x32xf32>
    %106 = vector.shape_cast %105 : vector<1x3x4x32xf32> to vector<3x4x32xf32>
    %cst_51 = arith.constant dense<0.000000e+00> : vector<4x32xf32>
    %107 = tpu.matmul %103, %4, %cst_51 {dimension_numbers = #tpu.dot_dimension_numbers<[1], [0], [0], [1], [0, 0, 1, 1], [], []>} : vector<4x32xf32>, vector<32x32xf32>, vector<4x32xf32> -> vector<4x32xf32>
    %108 = vector.broadcast %10 : vector<1x32xf32> to vector<4x32xf32>
    %109 = arith.addf %107, %108 : vector<4x32xf32>
    %cst_52 = arith.constant dense<0.000000e+00> : vector<4x32xf32>
    %110 = tpu.matmul %103, %6, %cst_52 {dimension_numbers = #tpu.dot_dimension_numbers<[1], [0], [0], [1], [0, 0, 1, 1], [], []>} : vector<4x32xf32>, vector<32x32xf32>, vector<4x32xf32> -> vector<4x32xf32>
    %111 = vector.broadcast %12 : vector<1x32xf32> to vector<4x32xf32>
    %112 = arith.addf %110, %111 : vector<4x32xf32>
    %cst_53 = arith.constant dense<0.000000e+00> : vector<4x32xf32>
    %113 = tpu.matmul %103, %8, %cst_53 {dimension_numbers = #tpu.dot_dimension_numbers<[1], [0], [0], [1], [0, 0, 1, 1], [], []>} : vector<4x32xf32>, vector<32x32xf32>, vector<4x32xf32> -> vector<4x32xf32>
    %114 = vector.broadcast %14 : vector<1x32xf32> to vector<4x32xf32>
    %115 = arith.addf %113, %114 : vector<4x32xf32>
    %116 = vector.extract_strided_slice %106 {offsets = [0, 0, 0], sizes = [1, 4, 32], strides = [1, 1, 1]} : vector<3x4x32xf32> to vector<1x4x32xf32>
    %117 = vector.shape_cast %116 : vector<1x4x32xf32> to vector<4x32xf32>
    %118 = arith.addf %117, %109 : vector<4x32xf32>
    %119 = arith.negf %118 : vector<4x32xf32>
    %120 = math.exp %119 : vector<4x32xf32>
    %cst_54 = arith.constant 1.000000e+00 : f32
    %121 = vector.broadcast %cst_54 : f32 to vector<4x32xf32>
    %122 = arith.addf %121, %120 : vector<4x32xf32>
    %123 = arith.divf %121, %122 : vector<4x32xf32>
    %124 = vector.extract_strided_slice %106 {offsets = [1, 0, 0], sizes = [1, 4, 32], strides = [1, 1, 1]} : vector<3x4x32xf32> to vector<1x4x32xf32>
    %125 = vector.shape_cast %124 : vector<1x4x32xf32> to vector<4x32xf32>
    %126 = arith.addf %125, %112 : vector<4x32xf32>
    %127 = arith.negf %126 : vector<4x32xf32>
    %128 = math.exp %127 : vector<4x32xf32>
    %cst_55 = arith.constant 1.000000e+00 : f32
    %129 = vector.broadcast %cst_55 : f32 to vector<4x32xf32>
    %130 = arith.addf %129, %128 : vector<4x32xf32>
    %131 = arith.divf %129, %130 : vector<4x32xf32>
    %132 = vector.extract_strided_slice %106 {offsets = [2, 0, 0], sizes = [1, 4, 32], strides = [1, 1, 1]} : vector<3x4x32xf32> to vector<1x4x32xf32>
    %133 = vector.shape_cast %132 : vector<1x4x32xf32> to vector<4x32xf32>
    %134 = arith.mulf %123, %115 : vector<4x32xf32>
    %135 = arith.addf %133, %134 : vector<4x32xf32>
    %136 = math.tanh %135 : vector<4x32xf32>
    %cst_56 = arith.constant 1.000000e+00 : f32
    %137 = vector.broadcast %cst_56 : f32 to vector<4x32xf32>
    %138 = arith.subf %137, %131 : vector<4x32xf32>
    %139 = arith.mulf %138, %136 : vector<4x32xf32>
    %140 = arith.mulf %131, %103 : vector<4x32xf32>
    %141 = arith.addf %139, %140 : vector<4x32xf32>
    %c0_57 = arith.constant 0 : index
    %c0_58 = arith.constant 0 : index
    %142 = vector.load %arg6[%c0_57, %c0_58] : memref<4x32xf32, #tpu.memory_space<vmem>>, vector<4x32xf32>
    tpu.vector_store %arg6[%c0_57, %c0_58], %141 {strides = array<i32>} : memref<4x32xf32, #tpu.memory_space<vmem>>, vector<4x32xf32>,
    %143 = arith.index_cast %c2_i32 : i32 to index
    %c0_59 = arith.constant 0 : index
    %c0_60 = arith.constant 0 : index
    %144 = vector.load %arg4[%143, %c0_59, %c0_60] : memref<8x4x32xf32, #tpu.memory_space<vmem>>, vector<1x4x32xf32>
    %145 = vector.shape_cast %144 : vector<1x4x32xf32> to vector<4x32xf32>
    %146 = vector.shape_cast %141 : vector<4x32xf32> to vector<1x4x32xf32>
    tpu.vector_store %arg4[%143, %c0_59, %c0_60], %146 {strides = array<i32>} : memref<8x4x32xf32, #tpu.memory_space<vmem>>, vector<1x4x32xf32>,
    %c3_i32 = arith.constant 3 : i32
    %c0_61 = arith.constant 0 : index
    %c0_62 = arith.constant 0 : index
    %147 = vector.load %arg6[%c0_61, %c0_62] : memref<4x32xf32, #tpu.memory_space<vmem>>, vector<4x32xf32>
    %148 = arith.index_cast %c3_i32 : i32 to index
    %c0_63 = arith.constant 0 : index
    %c0_64 = arith.constant 0 : index
    %c0_65 = arith.constant 0 : index
    %149 = vector.load %arg1[%148, %c0_63, %c0_64, %c0_65] : memref<8x3x4x32xf32, #tpu.memory_space<vmem>>, vector<1x3x4x32xf32>
    %150 = vector.shape_cast %149 : vector<1x3x4x32xf32> to vector<3x4x32xf32>
    %cst_66 = arith.constant dense<0.000000e+00> : vector<4x32xf32>
    %151 = tpu.matmul %147, %4, %cst_66 {dimension_numbers = #tpu.dot_dimension_numbers<[1], [0], [0], [1], [0, 0, 1, 1], [], []>} : vector<4x32xf32>, vector<32x32xf32>, vector<4x32xf32> -> vector<4x32xf32>
    %152 = vector.broadcast %10 : vector<1x32xf32> to vector<4x32xf32>
    %153 = arith.addf %151, %152 : vector<4x32xf32>
    %cst_67 = arith.constant dense<0.000000e+00> : vector<4x32xf32>
    %154 = tpu.matmul %147, %6, %cst_67 {dimension_numbers = #tpu.dot_dimension_numbers<[1], [0], [0], [1], [0, 0, 1, 1], [], []>} : vector<4x32xf32>, vector<32x32xf32>, vector<4x32xf32> -> vector<4x32xf32>
    %155 = vector.broadcast %12 : vector<1x32xf32> to vector<4x32xf32>
    %156 = arith.addf %154, %155 : vector<4x32xf32>
    %cst_68 = arith.constant dense<0.000000e+00> : vector<4x32xf32>
    %157 = tpu.matmul %147, %8, %cst_68 {dimension_numbers = #tpu.dot_dimension_numbers<[1], [0], [0], [1], [0, 0, 1, 1], [], []>} : vector<4x32xf32>, vector<32x32xf32>, vector<4x32xf32> -> vector<4x32xf32>
    %158 = vector.broadcast %14 : vector<1x32xf32> to vector<4x32xf32>
    %159 = arith.addf %157, %158 : vector<4x32xf32>
    %160 = vector.extract_strided_slice %150 {offsets = [0, 0, 0], sizes = [1, 4, 32], strides = [1, 1, 1]} : vector<3x4x32xf32> to vector<1x4x32xf32>
    %161 = vector.shape_cast %160 : vector<1x4x32xf32> to vector<4x32xf32>
    %162 = arith.addf %161, %153 : vector<4x32xf32>
    %163 = arith.negf %162 : vector<4x32xf32>
    %164 = math.exp %163 : vector<4x32xf32>
    %cst_69 = arith.constant 1.000000e+00 : f32
    %165 = vector.broadcast %cst_69 : f32 to vector<4x32xf32>
    %166 = arith.addf %165, %164 : vector<4x32xf32>
    %167 = arith.divf %165, %166 : vector<4x32xf32>
    %168 = vector.extract_strided_slice %150 {offsets = [1, 0, 0], sizes = [1, 4, 32], strides = [1, 1, 1]} : vector<3x4x32xf32> to vector<1x4x32xf32>
    %169 = vector.shape_cast %168 : vector<1x4x32xf32> to vector<4x32xf32>
    %170 = arith.addf %169, %156 : vector<4x32xf32>
    %171 = arith.negf %170 : vector<4x32xf32>
    %172 = math.exp %171 : vector<4x32xf32>
    %cst_70 = arith.constant 1.000000e+00 : f32
    %173 = vector.broadcast %cst_70 : f32 to vector<4x32xf32>
    %174 = arith.addf %173, %172 : vector<4x32xf32>
    %175 = arith.divf %173, %174 : vector<4x32xf32>
    %176 = vector.extract_strided_slice %150 {offsets = [2, 0, 0], sizes = [1, 4, 32], strides = [1, 1, 1]} : vector<3x4x32xf32> to vector<1x4x32xf32>
    %177 = vector.shape_cast %176 : vector<1x4x32xf32> to vector<4x32xf32>
    %178 = arith.mulf %167, %159 : vector<4x32xf32>
    %179 = arith.addf %177, %178 : vector<4x32xf32>
    %180 = math.tanh %179 : vector<4x32xf32>
    %cst_71 = arith.constant 1.000000e+00 : f32
    %181 = vector.broadcast %cst_71 : f32 to vector<4x32xf32>
    %182 = arith.subf %181, %175 : vector<4x32xf32>
    %183 = arith.mulf %182, %180 : vector<4x32xf32>
    %184 = arith.mulf %175, %147 : vector<4x32xf32>
    %185 = arith.addf %183, %184 : vector<4x32xf32>
    %c0_72 = arith.constant 0 : index
    %c0_73 = arith.constant 0 : index
    %186 = vector.load %arg6[%c0_72, %c0_73] : memref<4x32xf32, #tpu.memory_space<vmem>>, vector<4x32xf32>
    tpu.vector_store %arg6[%c0_72, %c0_73], %185 {strides = array<i32>} : memref<4x32xf32, #tpu.memory_space<vmem>>, vector<4x32xf32>,
    %187 = arith.index_cast %c3_i32 : i32 to index
    %c0_74 = arith.constant 0 : index
    %c0_75 = arith.constant 0 : index
    %188 = vector.load %arg4[%187, %c0_74, %c0_75] : memref<8x4x32xf32, #tpu.memory_space<vmem>>, vector<1x4x32xf32>
    %189 = vector.shape_cast %188 : vector<1x4x32xf32> to vector<4x32xf32>
    %190 = vector.shape_cast %185 : vector<4x32xf32> to vector<1x4x32xf32>
    tpu.vector_store %arg4[%187, %c0_74, %c0_75], %190 {strides = array<i32>} : memref<8x4x32xf32, #tpu.memory_space<vmem>>, vector<1x4x32xf32>,
    %c4_i32 = arith.constant 4 : i32
    %c0_76 = arith.constant 0 : index
    %c0_77 = arith.constant 0 : index
    %191 = vector.load %arg6[%c0_76, %c0_77] : memref<4x32xf32, #tpu.memory_space<vmem>>, vector<4x32xf32>
    %192 = arith.index_cast %c4_i32 : i32 to index
    %c0_78 = arith.constant 0 : index
    %c0_79 = arith.constant 0 : index
    %c0_80 = arith.constant 0 : index
    %193 = vector.load %arg1[%192, %c0_78, %c0_79, %c0_80] : memref<8x3x4x32xf32, #tpu.memory_space<vmem>>, vector<1x3x4x32xf32>
    %194 = vector.shape_cast %193 : vector<1x3x4x32xf32> to vector<3x4x32xf32>
    %cst_81 = arith.constant dense<0.000000e+00> : vector<4x32xf32>
    %195 = tpu.matmul %191, %4, %cst_81 {dimension_numbers = #tpu.dot_dimension_numbers<[1], [0], [0], [1], [0, 0, 1, 1], [], []>} : vector<4x32xf32>, vector<32x32xf32>, vector<4x32xf32> -> vector<4x32xf32>
    %196 = vector.broadcast %10 : vector<1x32xf32> to vector<4x32xf32>
    %197 = arith.addf %195, %196 : vector<4x32xf32>
    %cst_82 = arith.constant dense<0.000000e+00> : vector<4x32xf32>
    %198 = tpu.matmul %191, %6, %cst_82 {dimension_numbers = #tpu.dot_dimension_numbers<[1], [0], [0], [1], [0, 0, 1, 1], [], []>} : vector<4x32xf32>, vector<32x32xf32>, vector<4x32xf32> -> vector<4x32xf32>
    %199 = vector.broadcast %12 : vector<1x32xf32> to vector<4x32xf32>
    %200 = arith.addf %198, %199 : vector<4x32xf32>
    %cst_83 = arith.constant dense<0.000000e+00> : vector<4x32xf32>
    %201 = tpu.matmul %191, %8, %cst_83 {dimension_numbers = #tpu.dot_dimension_numbers<[1], [0], [0], [1], [0, 0, 1, 1], [], []>} : vector<4x32xf32>, vector<32x32xf32>, vector<4x32xf32> -> vector<4x32xf32>
    %202 = vector.broadcast %14 : vector<1x32xf32> to vector<4x32xf32>
    %203 = arith.addf %201, %202 : vector<4x32xf32>
    %204 = vector.extract_strided_slice %194 {offsets = [0, 0, 0], sizes = [1, 4, 32], strides = [1, 1, 1]} : vector<3x4x32xf32> to vector<1x4x32xf32>
    %205 = vector.shape_cast %204 : vector<1x4x32xf32> to vector<4x32xf32>
    %206 = arith.addf %205, %197 : vector<4x32xf32>
    %207 = arith.negf %206 : vector<4x32xf32>
    %208 = math.exp %207 : vector<4x32xf32>
    %cst_84 = arith.constant 1.000000e+00 : f32
    %209 = vector.broadcast %cst_84 : f32 to vector<4x32xf32>
    %210 = arith.addf %209, %208 : vector<4x32xf32>
    %211 = arith.divf %209, %210 : vector<4x32xf32>
    %212 = vector.extract_strided_slice %194 {offsets = [1, 0, 0], sizes = [1, 4, 32], strides = [1, 1, 1]} : vector<3x4x32xf32> to vector<1x4x32xf32>
    %213 = vector.shape_cast %212 : vector<1x4x32xf32> to vector<4x32xf32>
    %214 = arith.addf %213, %200 : vector<4x32xf32>
    %215 = arith.negf %214 : vector<4x32xf32>
    %216 = math.exp %215 : vector<4x32xf32>
    %cst_85 = arith.constant 1.000000e+00 : f32
    %217 = vector.broadcast %cst_85 : f32 to vector<4x32xf32>
    %218 = arith.addf %217, %216 : vector<4x32xf32>
    %219 = arith.divf %217, %218 : vector<4x32xf32>
    %220 = vector.extract_strided_slice %194 {offsets = [2, 0, 0], sizes = [1, 4, 32], strides = [1, 1, 1]} : vector<3x4x32xf32> to vector<1x4x32xf32>
    %221 = vector.shape_cast %220 : vector<1x4x32xf32> to vector<4x32xf32>
    %222 = arith.mulf %211, %203 : vector<4x32xf32>
    %223 = arith.addf %221, %222 : vector<4x32xf32>
    %224 = math.tanh %223 : vector<4x32xf32>
    %cst_86 = arith.constant 1.000000e+00 : f32
    %225 = vector.broadcast %cst_86 : f32 to vector<4x32xf32>
    %226 = arith.subf %225, %219 : vector<4x32xf32>
    %227 = arith.mulf %226, %224 : vector<4x32xf32>
    %228 = arith.mulf %219, %191 : vector<4x32xf32>
    %229 = arith.addf %227, %228 : vector<4x32xf32>
    %c0_87 = arith.constant 0 : index
    %c0_88 = arith.constant 0 : index
    %230 = vector.load %arg6[%c0_87, %c0_88] : memref<4x32xf32, #tpu.memory_space<vmem>>, vector<4x32xf32>
    tpu.vector_store %arg6[%c0_87, %c0_88], %229 {strides = array<i32>} : memref<4x32xf32, #tpu.memory_space<vmem>>, vector<4x32xf32>,
    %231 = arith.index_cast %c4_i32 : i32 to index
    %c0_89 = arith.constant 0 : index
    %c0_90 = arith.constant 0 : index
    %232 = vector.load %arg4[%231, %c0_89, %c0_90] : memref<8x4x32xf32, #tpu.memory_space<vmem>>, vector<1x4x32xf32>
    %233 = vector.shape_cast %232 : vector<1x4x32xf32> to vector<4x32xf32>
    %234 = vector.shape_cast %229 : vector<4x32xf32> to vector<1x4x32xf32>
    tpu.vector_store %arg4[%231, %c0_89, %c0_90], %234 {strides = array<i32>} : memref<8x4x32xf32, #tpu.memory_space<vmem>>, vector<1x4x32xf32>,
    %c5_i32 = arith.constant 5 : i32
    %c0_91 = arith.constant 0 : index
    %c0_92 = arith.constant 0 : index
    %235 = vector.load %arg6[%c0_91, %c0_92] : memref<4x32xf32, #tpu.memory_space<vmem>>, vector<4x32xf32>
    %236 = arith.index_cast %c5_i32 : i32 to index
    %c0_93 = arith.constant 0 : index
    %c0_94 = arith.constant 0 : index
    %c0_95 = arith.constant 0 : index
    %237 = vector.load %arg1[%236, %c0_93, %c0_94, %c0_95] : memref<8x3x4x32xf32, #tpu.memory_space<vmem>>, vector<1x3x4x32xf32>
    %238 = vector.shape_cast %237 : vector<1x3x4x32xf32> to vector<3x4x32xf32>
    %cst_96 = arith.constant dense<0.000000e+00> : vector<4x32xf32>
    %239 = tpu.matmul %235, %4, %cst_96 {dimension_numbers = #tpu.dot_dimension_numbers<[1], [0], [0], [1], [0, 0, 1, 1], [], []>} : vector<4x32xf32>, vector<32x32xf32>, vector<4x32xf32> -> vector<4x32xf32>
    %240 = vector.broadcast %10 : vector<1x32xf32> to vector<4x32xf32>
    %241 = arith.addf %239, %240 : vector<4x32xf32>
    %cst_97 = arith.constant dense<0.000000e+00> : vector<4x32xf32>
    %242 = tpu.matmul %235, %6, %cst_97 {dimension_numbers = #tpu.dot_dimension_numbers<[1], [0], [0], [1], [0, 0, 1, 1], [], []>} : vector<4x32xf32>, vector<32x32xf32>, vector<4x32xf32> -> vector<4x32xf32>
    %243 = vector.broadcast %12 : vector<1x32xf32> to vector<4x32xf32>
    %244 = arith.addf %242, %243 : vector<4x32xf32>
    %cst_98 = arith.constant dense<0.000000e+00> : vector<4x32xf32>
    %245 = tpu.matmul %235, %8, %cst_98 {dimension_numbers = #tpu.dot_dimension_numbers<[1], [0], [0], [1], [0, 0, 1, 1], [], []>} : vector<4x32xf32>, vector<32x32xf32>, vector<4x32xf32> -> vector<4x32xf32>
    %246 = vector.broadcast %14 : vector<1x32xf32> to vector<4x32xf32>
    %247 = arith.addf %245, %246 : vector<4x32xf32>
    %248 = vector.extract_strided_slice %238 {offsets = [0, 0, 0], sizes = [1, 4, 32], strides = [1, 1, 1]} : vector<3x4x32xf32> to vector<1x4x32xf32>
    %249 = vector.shape_cast %248 : vector<1x4x32xf32> to vector<4x32xf32>
    %250 = arith.addf %249, %241 : vector<4x32xf32>
    %251 = arith.negf %250 : vector<4x32xf32>
    %252 = math.exp %251 : vector<4x32xf32>
    %cst_99 = arith.constant 1.000000e+00 : f32
    %253 = vector.broadcast %cst_99 : f32 to vector<4x32xf32>
    %254 = arith.addf %253, %252 : vector<4x32xf32>
    %255 = arith.divf %253, %254 : vector<4x32xf32>
    %256 = vector.extract_strided_slice %238 {offsets = [1, 0, 0], sizes = [1, 4, 32], strides = [1, 1, 1]} : vector<3x4x32xf32> to vector<1x4x32xf32>
    %257 = vector.shape_cast %256 : vector<1x4x32xf32> to vector<4x32xf32>
    %258 = arith.addf %257, %244 : vector<4x32xf32>
    %259 = arith.negf %258 : vector<4x32xf32>
    %260 = math.exp %259 : vector<4x32xf32>
    %cst_100 = arith.constant 1.000000e+00 : f32
    %261 = vector.broadcast %cst_100 : f32 to vector<4x32xf32>
    %262 = arith.addf %261, %260 : vector<4x32xf32>
    %263 = arith.divf %261, %262 : vector<4x32xf32>
    %264 = vector.extract_strided_slice %238 {offsets = [2, 0, 0], sizes = [1, 4, 32], strides = [1, 1, 1]} : vector<3x4x32xf32> to vector<1x4x32xf32>
    %265 = vector.shape_cast %264 : vector<1x4x32xf32> to vector<4x32xf32>
    %266 = arith.mulf %255, %247 : vector<4x32xf32>
    %267 = arith.addf %265, %266 : vector<4x32xf32>
    %268 = math.tanh %267 : vector<4x32xf32>
    %cst_101 = arith.constant 1.000000e+00 : f32
    %269 = vector.broadcast %cst_101 : f32 to vector<4x32xf32>
    %270 = arith.subf %269, %263 : vector<4x32xf32>
    %271 = arith.mulf %270, %268 : vector<4x32xf32>
    %272 = arith.mulf %263, %235 : vector<4x32xf32>
    %273 = arith.addf %271, %272 : vector<4x32xf32>
    %c0_102 = arith.constant 0 : index
    %c0_103 = arith.constant 0 : index
    %274 = vector.load %arg6[%c0_102, %c0_103] : memref<4x32xf32, #tpu.memory_space<vmem>>, vector<4x32xf32>
    tpu.vector_store %arg6[%c0_102, %c0_103], %273 {strides = array<i32>} : memref<4x32xf32, #tpu.memory_space<vmem>>, vector<4x32xf32>,
    %275 = arith.index_cast %c5_i32 : i32 to index
    %c0_104 = arith.constant 0 : index
    %c0_105 = arith.constant 0 : index
    %276 = vector.load %arg4[%275, %c0_104, %c0_105] : memref<8x4x32xf32, #tpu.memory_space<vmem>>, vector<1x4x32xf32>
    %277 = vector.shape_cast %276 : vector<1x4x32xf32> to vector<4x32xf32>
    %278 = vector.shape_cast %273 : vector<4x32xf32> to vector<1x4x32xf32>
    tpu.vector_store %arg4[%275, %c0_104, %c0_105], %278 {strides = array<i32>} : memref<8x4x32xf32, #tpu.memory_space<vmem>>, vector<1x4x32xf32>,
    %c6_i32 = arith.constant 6 : i32
    %c0_106 = arith.constant 0 : index
    %c0_107 = arith.constant 0 : index
    %279 = vector.load %arg6[%c0_106, %c0_107] : memref<4x32xf32, #tpu.memory_space<vmem>>, vector<4x32xf32>
    %280 = arith.index_cast %c6_i32 : i32 to index
    %c0_108 = arith.constant 0 : index
    %c0_109 = arith.constant 0 : index
    %c0_110 = arith.constant 0 : index
    %281 = vector.load %arg1[%280, %c0_108, %c0_109, %c0_110] : memref<8x3x4x32xf32, #tpu.memory_space<vmem>>, vector<1x3x4x32xf32>
    %282 = vector.shape_cast %281 : vector<1x3x4x32xf32> to vector<3x4x32xf32>
    %cst_111 = arith.constant dense<0.000000e+00> : vector<4x32xf32>
    %283 = tpu.matmul %279, %4, %cst_111 {dimension_numbers = #tpu.dot_dimension_numbers<[1], [0], [0], [1], [0, 0, 1, 1], [], []>} : vector<4x32xf32>, vector<32x32xf32>, vector<4x32xf32> -> vector<4x32xf32>
    %284 = vector.broadcast %10 : vector<1x32xf32> to vector<4x32xf32>
    %285 = arith.addf %283, %284 : vector<4x32xf32>
    %cst_112 = arith.constant dense<0.000000e+00> : vector<4x32xf32>
    %286 = tpu.matmul %279, %6, %cst_112 {dimension_numbers = #tpu.dot_dimension_numbers<[1], [0], [0], [1], [0, 0, 1, 1], [], []>} : vector<4x32xf32>, vector<32x32xf32>, vector<4x32xf32> -> vector<4x32xf32>
    %287 = vector.broadcast %12 : vector<1x32xf32> to vector<4x32xf32>
    %288 = arith.addf %286, %287 : vector<4x32xf32>
    %cst_113 = arith.constant dense<0.000000e+00> : vector<4x32xf32>
    %289 = tpu.matmul %279, %8, %cst_113 {dimension_numbers = #tpu.dot_dimension_numbers<[1], [0], [0], [1], [0, 0, 1, 1], [], []>} : vector<4x32xf32>, vector<32x32xf32>, vector<4x32xf32> -> vector<4x32xf32>
    %290 = vector.broadcast %14 : vector<1x32xf32> to vector<4x32xf32>
    %291 = arith.addf %289, %290 : vector<4x32xf32>
    %292 = vector.extract_strided_slice %282 {offsets = [0, 0, 0], sizes = [1, 4, 32], strides = [1, 1, 1]} : vector<3x4x32xf32> to vector<1x4x32xf32>
    %293 = vector.shape_cast %292 : vector<1x4x32xf32> to vector<4x32xf32>
    %294 = arith.addf %293, %285 : vector<4x32xf32>
    %295 = arith.negf %294 : vector<4x32xf32>
    %296 = math.exp %295 : vector<4x32xf32>
    %cst_114 = arith.constant 1.000000e+00 : f32
    %297 = vector.broadcast %cst_114 : f32 to vector<4x32xf32>
    %298 = arith.addf %297, %296 : vector<4x32xf32>
    %299 = arith.divf %297, %298 : vector<4x32xf32>
    %300 = vector.extract_strided_slice %282 {offsets = [1, 0, 0], sizes = [1, 4, 32], strides = [1, 1, 1]} : vector<3x4x32xf32> to vector<1x4x32xf32>
    %301 = vector.shape_cast %300 : vector<1x4x32xf32> to vector<4x32xf32>
    %302 = arith.addf %301, %288 : vector<4x32xf32>
    %303 = arith.negf %302 : vector<4x32xf32>
    %304 = math.exp %303 : vector<4x32xf32>
    %cst_115 = arith.constant 1.000000e+00 : f32
    %305 = vector.broadcast %cst_115 : f32 to vector<4x32xf32>
    %306 = arith.addf %305, %304 : vector<4x32xf32>
    %307 = arith.divf %305, %306 : vector<4x32xf32>
    %308 = vector.extract_strided_slice %282 {offsets = [2, 0, 0], sizes = [1, 4, 32], strides = [1, 1, 1]} : vector<3x4x32xf32> to vector<1x4x32xf32>
    %309 = vector.shape_cast %308 : vector<1x4x32xf32> to vector<4x32xf32>
    %310 = arith.mulf %299, %291 : vector<4x32xf32>
    %311 = arith.addf %309, %310 : vector<4x32xf32>
    %312 = math.tanh %311 : vector<4x32xf32>
    %cst_116 = arith.constant 1.000000e+00 : f32
    %313 = vector.broadcast %cst_116 : f32 to vector<4x32xf32>
    %314 = arith.subf %313, %307 : vector<4x32xf32>
    %315 = arith.mulf %314, %312 : vector<4x32xf32>
    %316 = arith.mulf %307, %279 : vector<4x32xf32>
    %317 = arith.addf %315, %316 : vector<4x32xf32>
    %c0_117 = arith.constant 0 : index
    %c0_118 = arith.constant 0 : index
    %318 = vector.load %arg6[%c0_117, %c0_118] : memref<4x32xf32, #tpu.memory_space<vmem>>, vector<4x32xf32>
    tpu.vector_store %arg6[%c0_117, %c0_118], %317 {strides = array<i32>} : memref<4x32xf32, #tpu.memory_space<vmem>>, vector<4x32xf32>,
    %319 = arith.index_cast %c6_i32 : i32 to index
    %c0_119 = arith.constant 0 : index
    %c0_120 = arith.constant 0 : index
    %320 = vector.load %arg4[%319, %c0_119, %c0_120] : memref<8x4x32xf32, #tpu.memory_space<vmem>>, vector<1x4x32xf32>
    %321 = vector.shape_cast %320 : vector<1x4x32xf32> to vector<4x32xf32>
    %322 = vector.shape_cast %317 : vector<4x32xf32> to vector<1x4x32xf32>
    tpu.vector_store %arg4[%319, %c0_119, %c0_120], %322 {strides = array<i32>} : memref<8x4x32xf32, #tpu.memory_space<vmem>>, vector<1x4x32xf32>,
    %c7_i32 = arith.constant 7 : i32
    %c0_121 = arith.constant 0 : index
    %c0_122 = arith.constant 0 : index
    %323 = vector.load %arg6[%c0_121, %c0_122] : memref<4x32xf32, #tpu.memory_space<vmem>>, vector<4x32xf32>
    %324 = arith.index_cast %c7_i32 : i32 to index
    %c0_123 = arith.constant 0 : index
    %c0_124 = arith.constant 0 : index
    %c0_125 = arith.constant 0 : index
    %325 = vector.load %arg1[%324, %c0_123, %c0_124, %c0_125] : memref<8x3x4x32xf32, #tpu.memory_space<vmem>>, vector<1x3x4x32xf32>
    %326 = vector.shape_cast %325 : vector<1x3x4x32xf32> to vector<3x4x32xf32>
    %cst_126 = arith.constant dense<0.000000e+00> : vector<4x32xf32>
    %327 = tpu.matmul %323, %4, %cst_126 {dimension_numbers = #tpu.dot_dimension_numbers<[1], [0], [0], [1], [0, 0, 1, 1], [], []>} : vector<4x32xf32>, vector<32x32xf32>, vector<4x32xf32> -> vector<4x32xf32>
    %328 = vector.broadcast %10 : vector<1x32xf32> to vector<4x32xf32>
    %329 = arith.addf %327, %328 : vector<4x32xf32>
    %cst_127 = arith.constant dense<0.000000e+00> : vector<4x32xf32>
    %330 = tpu.matmul %323, %6, %cst_127 {dimension_numbers = #tpu.dot_dimension_numbers<[1], [0], [0], [1], [0, 0, 1, 1], [], []>} : vector<4x32xf32>, vector<32x32xf32>, vector<4x32xf32> -> vector<4x32xf32>
    %331 = vector.broadcast %12 : vector<1x32xf32> to vector<4x32xf32>
    %332 = arith.addf %330, %331 : vector<4x32xf32>
    %cst_128 = arith.constant dense<0.000000e+00> : vector<4x32xf32>
    %333 = tpu.matmul %323, %8, %cst_128 {dimension_numbers = #tpu.dot_dimension_numbers<[1], [0], [0], [1], [0, 0, 1, 1], [], []>} : vector<4x32xf32>, vector<32x32xf32>, vector<4x32xf32> -> vector<4x32xf32>
    %334 = vector.broadcast %14 : vector<1x32xf32> to vector<4x32xf32>
    %335 = arith.addf %333, %334 : vector<4x32xf32>
    %336 = vector.extract_strided_slice %326 {offsets = [0, 0, 0], sizes = [1, 4, 32], strides = [1, 1, 1]} : vector<3x4x32xf32> to vector<1x4x32xf32>
    %337 = vector.shape_cast %336 : vector<1x4x32xf32> to vector<4x32xf32>
    %338 = arith.addf %337, %329 : vector<4x32xf32>
    %339 = arith.negf %338 : vector<4x32xf32>
    %340 = math.exp %339 : vector<4x32xf32>
    %cst_129 = arith.constant 1.000000e+00 : f32
    %341 = vector.broadcast %cst_129 : f32 to vector<4x32xf32>
    %342 = arith.addf %341, %340 : vector<4x32xf32>
    %343 = arith.divf %341, %342 : vector<4x32xf32>
    %344 = vector.extract_strided_slice %326 {offsets = [1, 0, 0], sizes = [1, 4, 32], strides = [1, 1, 1]} : vector<3x4x32xf32> to vector<1x4x32xf32>
    %345 = vector.shape_cast %344 : vector<1x4x32xf32> to vector<4x32xf32>
    %346 = arith.addf %345, %332 : vector<4x32xf32>
    %347 = arith.negf %346 : vector<4x32xf32>
    %348 = math.exp %347 : vector<4x32xf32>
    %cst_130 = arith.constant 1.000000e+00 : f32
    %349 = vector.broadcast %cst_130 : f32 to vector<4x32xf32>
    %350 = arith.addf %349, %348 : vector<4x32xf32>
    %351 = arith.divf %349, %350 : vector<4x32xf32>
    %352 = vector.extract_strided_slice %326 {offsets = [2, 0, 0], sizes = [1, 4, 32], strides = [1, 1, 1]} : vector<3x4x32xf32> to vector<1x4x32xf32>
    %353 = vector.shape_cast %352 : vector<1x4x32xf32> to vector<4x32xf32>
    %354 = arith.mulf %343, %335 : vector<4x32xf32>
    %355 = arith.addf %353, %354 : vector<4x32xf32>
    %356 = math.tanh %355 : vector<4x32xf32>
    %cst_131 = arith.constant 1.000000e+00 : f32
    %357 = vector.broadcast %cst_131 : f32 to vector<4x32xf32>
    %358 = arith.subf %357, %351 : vector<4x32xf32>
    %359 = arith.mulf %358, %356 : vector<4x32xf32>
    %360 = arith.mulf %351, %323 : vector<4x32xf32>
    %361 = arith.addf %359, %360 : vector<4x32xf32>
    %c0_132 = arith.constant 0 : index
    %c0_133 = arith.constant 0 : index
    %362 = vector.load %arg6[%c0_132, %c0_133] : memref<4x32xf32, #tpu.memory_space<vmem>>, vector<4x32xf32>
    tpu.vector_store %arg6[%c0_132, %c0_133], %361 {strides = array<i32>} : memref<4x32xf32, #tpu.memory_space<vmem>>, vector<4x32xf32>,
    %363 = arith.index_cast %c7_i32 : i32 to index
    %c0_134 = arith.constant 0 : index
    %c0_135 = arith.constant 0 : index
    %364 = vector.load %arg4[%363, %c0_134, %c0_135] : memref<8x4x32xf32, #tpu.memory_space<vmem>>, vector<1x4x32xf32>
    %365 = vector.shape_cast %364 : vector<1x4x32xf32> to vector<4x32xf32>
    %366 = vector.shape_cast %361 : vector<4x32xf32> to vector<1x4x32xf32>
    tpu.vector_store %arg4[%363, %c0_134, %c0_135], %366 {strides = array<i32>} : memref<8x4x32xf32, #tpu.memory_space<vmem>>, vector<1x4x32xf32>,
    %c8_i32 = arith.constant 8 : i32
    %c0_i32_136 = arith.constant 0 : i32
    %367 = arith.cmpi eq, %arg0, %c0_i32_136 : i32
    %368 = arith.extui %367 : i1 to i32
    %c0_i32_137 = arith.constant 0 : i32
    %369 = arith.cmpi ne, %368, %c0_i32_137 : i32
    scf.if %369 {
      %c0_138 = arith.constant 0 : index
      %c0_139 = arith.constant 0 : index
      %370 = vector.load %arg6[%c0_138, %c0_139] : memref<4x32xf32, #tpu.memory_space<vmem>>, vector<4x32xf32>
      %c0_140 = arith.constant 0 : index
      %c0_141 = arith.constant 0 : index
      %c0_142 = arith.constant 0 : index
      %371 = vector.load %arg5[%c0_140, %c0_141, %c0_142] : memref<1x4x32xf32, #tpu.memory_space<vmem>>, vector<1x4x32xf32>
      %372 = vector.shape_cast %371 : vector<1x4x32xf32> to vector<4x32xf32>
      %373 = vector.shape_cast %370 : vector<4x32xf32> to vector<1x4x32xf32>
      tpu.vector_store %arg5[%c0_140, %c0_141, %c0_142], %373 {strides = array<i32>} : memref<1x4x32xf32, #tpu.memory_space<vmem>>, vector<1x4x32xf32>,
    } else {
    }
    return
  }
  func.func @transform_0(%arg0: i32) -> (i32, i32, i32, i32) {
    %c0_i32 = arith.constant 0 : i32
    %c0_i32_0 = arith.constant 0 : i32
    %c0_i32_1 = arith.constant 0 : i32
    %c0_i32_2 = arith.constant 0 : i32
    return %arg0, %c0_i32, %c0_i32_0, %c0_i32_1 : i32, i32, i32, i32
  }
  func.func @transform_1(%arg0: i32) -> (i32, i32, i32) {
    %c0_i32 = arith.constant 0 : i32
    %c0_i32_0 = arith.constant 0 : i32
    %c0_i32_1 = arith.constant 0 : i32
    %c0_i32_2 = arith.constant 0 : i32
    return %c0_i32, %c0_i32_0, %c0_i32_1 : i32, i32, i32
  }
  func.func @transform_2(%arg0: i32) -> (i32, i32, i32) {
    %c0_i32 = arith.constant 0 : i32
    %c0_i32_0 = arith.constant 0 : i32
    %c0_i32_1 = arith.constant 0 : i32
    %c0_i32_2 = arith.constant 0 : i32
    return %c0_i32, %c0_i32_0, %c0_i32_1 : i32, i32, i32
  }
  func.func @transform_3(%arg0: i32) -> (i32, i32, i32) {
    %c0_i32 = arith.constant 0 : i32
    %c0_i32_0 = arith.constant 0 : i32
    %c0_i32_1 = arith.constant 0 : i32
    return %arg0, %c0_i32, %c0_i32_0 : i32, i32, i32
  }
  func.func @transform_4(%arg0: i32) -> (i32, i32, i32) {
    %c0_i32 = arith.constant 0 : i32
    %c0_i32_0 = arith.constant 0 : i32
    %c0_i32_1 = arith.constant 0 : i32
    %c0_i32_2 = arith.constant 0 : i32
    return %c0_i32, %c0_i32_0, %c0_i32_1 : i32, i32, i32
  }
}

</mosaic_0001>

<llo_original>
// kernel: encoder_forward.1
$region0: #{encoder_forward.1}
  #allocation0 [shape = 'u32[]', space=smem, size = 0x4, offset = 0x4, fixed_abs, tag = 'smem constant byte address 0x4 - core index']
  #allocation1 [shape = 'u32[144,128]{1,0:T(1,128)}', space=vmem, size = 0x12000, scoped, tag = 'internal scratch']
  #allocation2 [shape = 'f32[4,32]{1,0:T(4,128)}', space=vmem, size = 0x800, scoped, tag = 'scratch operand']
  %s0 = inlined_call_operand.vmem [shape: f32[8,3,4,32], index: 0, kind: input, shape index: {}]
  %s1 = inlined_call_operand.vmem [shape: f32[3,32,32], index: 1, kind: input, shape index: {}]
  %s2 = inlined_call_operand.vmem [shape: f32[3,1,32], index: 2, kind: input, shape index: {}]
  %s3 = inlined_call_operand.vmem [shape: f32[8,4,32], index: 3, kind: output, shape index: {0}]
  %s4 = inlined_call_operand.hbm [shape: f32[1,4,32], index: 4, kind: output, shape index: {1}]
  %5 = xla_tuple %s3, %s4
  %s6 = sld [smem:[#allocation0]]
  $region38: #{encoder_forward.1} parent=0
    _
  %s8 = ssub.s32 1, %s6
  %s9 = scalar_select 0, %s8, %s6
  $region1: #{encoder_forward.1} parent=0
    #allocation3 [shape = 'u8[2048]{0}', space=vmem, size = 0x800, scoped, tag = 'output window, operand 1, single buffered']
    #allocation4 [shape = 's32[1]{0}', space=sflag, size = 0x4, scoped, tag = 'scoped memory for encoder_forward.1']
    %10 = vsyncpa [#allocation4], 0
    // Predicated region
    $region2: #{encoder_forward.1} parent=1 // pred_check
      _
    $region3: #{encoder_forward.1} parent=1 // pred_check_branch
      %12 = sbr.rel (0) target = $region5
    $region4: #{encoder_forward.1} parent=1 // pred_region
      _
    $region5: #{encoder_forward.1} parent=1 // pred_fallthru
      _
    // Predicated region
    $region6: #{encoder_forward.1} parent=1 // pred_check
      _
    $region7: #{encoder_forward.1} parent=1 // pred_check_branch
      %14 = sbr.rel (0) target = $region9
    $region8: #{encoder_forward.1} parent=1 // pred_region
      _
    $region9: #{encoder_forward.1} parent=1 // pred_fallthru
      _
    // Predicated region
    $region10: #{encoder_forward.1} parent=1 // pred_check
      _
    $region11: #{encoder_forward.1} parent=1 // pred_check_branch
      %16 = sbr.rel (0) target = $region13
    $region12: #{encoder_forward.1} parent=1 // pred_region
      _
    $region13: #{encoder_forward.1} parent=1 // pred_fallthru
      _
    %p17 = scmp.eq.s32.totalorder 0, 0
    // Predicated region
    $region14: #{encoder_forward.1} parent=1 // pred_check
      %p18 = pneg %p17
    $region15: #{encoder_forward.1} parent=1 // pred_check_branch
      %20 = sbr.rel (%p18) target = $region17
    $region16: #{encoder_forward.1} parent=1 // pred_region
      %vm21 = vcmask 257024
      %22 = vst.msk [vmem:[#allocation2] sm:$0xf] %vm21, 0.0
    $region17: #{encoder_forward.1} parent=1 // pred_fallthru
      _
    %v23 = vld [vmem:[%s1] sm:$0xff]
    %v24 = vld [vmem:[%s1 + $0x8] sm:$0xff]
    %v25 = vld [vmem:[%s1 + $0x10] sm:$0xff]
    %v26 = vld [vmem:[%s1 + $0x18] sm:$0xff]
    %s27 = scalar_lea.vmem %s1, 32
    %v28 = vld [vmem:[%s27] sm:$0xff]
    %v29 = vld [vmem:[%s27 + $0x8] sm:$0xff]
    %v30 = vld [vmem:[%s27 + $0x10] sm:$0xff]
    %v31 = vld [vmem:[%s27 + $0x18] sm:$0xff]
    %s32 = scalar_lea.vmem %s1, 64
    %v33 = vld [vmem:[%s32] sm:$0xff]
    %v34 = vld [vmem:[%s32 + $0x8] sm:$0xff]
    %v35 = vld [vmem:[%s32 + $0x10] sm:$0xff]
    %v36 = vld [vmem:[%s32 + $0x18] sm:$0xff]
    %v37 = vld [vmem:[%s2] sm:$0x1]
    %s38 = scalar_lea.vmem %s2, 1
    %v39 = vld [vmem:[%s38] sm:$0x1]
    %s40 = scalar_lea.vmem %s2, 2
    %v41 = vld [vmem:[%s40] sm:$0x1]
    %v42 = vld [vmem:[#allocation2] sm:$0xf]
    %v43 = vld [vmem:[%s0] sm:$0xf]
    %v44 = vld [vmem:[%s0 + $0x4] sm:$0xf]
    %v45 = vld [vmem:[%s0 + $0x8] sm:$0xf]
    %v47 = vlaneseq
    %v48 = vshrl.u32 %v47, 7
    %v49 = vsub.s32 0, %v48
    %v50 = vrot.slane %v37, %v49
    %vm52 = vcmask 261120
    %v54 = vsel %vm52, %v42, 0
    %56 = vmatprep.subr.mxu0 0.0
    %57 = vmatpush1.msra.mxu0 %v23
    %58 = vmatprep.subr.mxu0 0.0
    %59 = vmatpush1.msra.mxu0 %v24
    %60 = vmatprep.subr.mxu0 0.0
    %61 = vmatpush1.msra.mxu0 %v25
    %62 = vmatprep.subr.mxu0 0.0
    %63 = vmatpush1.msra.mxu0 %v26
    %64 = vmatprep.subr.mxu0 0.0
    %65 = vmatpush1.msra.mxu0 0.0
    %66 = vmatprep.subr.mxu0 0.0
    %67 = vmatpush1.msra.mxu0 0.0
    %68 = vmatprep.subr.mxu0 0.0
    %69 = vmatpush1.msra.mxu0 0.0
    %70 = vmatprep.subr.mxu0 0.0
    %71 = vmatpush1.msra.mxu0 0.0
    %72 = vmatprep.subr.mxu0 0.0
    %73 = vmatpush1.msra.mxu0 0.0
    %74 = vmatprep.subr.mxu0 0.0
    %75 = vmatpush1.msra.mxu0 0.0
    %76 = vmatprep.subr.mxu0 0.0
    %77 = vmatpush1.msra.mxu0 0.0
    %78 = vmatprep.subr.mxu0 0.0
    %79 = vmatpush1.msra.mxu0 0.0
    %80 = vmatprep.subr.mxu0 0.0
    %81 = vmatpush1.msra.mxu0 0.0
    %82 = vmatprep.subr.mxu0 0.0
    %83 = vmatpush1.msra.mxu0 0.0
    %84 = vmatprep.subr.mxu0 0.0
    %85 = vmatpush1.msra.mxu0 0.0
    %86 = vmatprep.subr.mxu0 0.0
    %87 = vmatpush1.msra.mxu0 0.0
    %88 = vmatprep.subr.mxu0 0.0
    %89 = vmatpush1.msra.mxu0 0.0
    %90 = vmatprep.subr.mxu0 0.0
    %91 = vmatpush1.msra.mxu0 0.0
    %92 = vmatprep.subr.mxu0 0.0
    %93 = vmatpush1.msra.mxu0 0.0
    %94 = vmatprep.subr.mxu0 0.0
    %95 = vmatpush1.msra.mxu0 0.0
    %96 = vmatprep.subr.mxu0 0.0
    %97 = vmatpush1.msra.mxu0 0.0
    %98 = vmatprep.subr.mxu0 0.0
    %99 = vmatpush1.msra.mxu0 0.0
    %100 = vmatprep.subr.mxu0 0.0
    %101 = vmatpush1.msra.mxu0 0.0
    %102 = vmatprep.subr.mxu0 0.0
    %103 = vmatpush1.msra.mxu0 0.0
    %104 = vmatprep.subr.mxu0 0.0
    %105 = vmatpush1.msra.mxu0 0.0
    %106 = vmatprep.subr.mxu0 0.0
    %107 = vmatpush1.msra.mxu0 0.0
    %108 = vmatprep.subr.mxu0 0.0
    %109 = vmatpush1.msra.mxu0 0.0
    %110 = vmatprep.subr.mxu0 0.0
    %111 = vmatpush1.msra.mxu0 0.0
    %112 = vmatprep.subr.mxu0 0.0
    %113 = vmatpush1.msra.mxu0 0.0
    %114 = vmatprep.subr.mxu0 0.0
    %115 = vmatpush1.msra.mxu0 0.0
    %116 = vmatprep.subr.mxu0 0.0
    %117 = vmatpush1.msra.mxu0 0.0
    %118 = vmatprep.subr.mxu0 0.0
    %119 = vmatpush1.msra.mxu0 0.0
    %120 = vmatprep.mubr.f32.mxu0 0.0
    %121 = vmatmul.mubr.f32.gmra.mrb[0].mxu0 %v54
    %v122 = vpop.f32.mrb[0].mxu0
    %v123 = vadd.f32 %v50, %v122
    %v124 = vpop.f32.mrb[0].mxu0
    %125 = vdwg.mxu0
    %v127 = vlaneseq
    %v128 = vshrl.u32 %v127, 7
    %v129 = vsub.s32 0, %v128
    %v130 = vrot.slane %v39, %v129
    %132 = vmatprep.subr.mxu0 0.0
    %133 = vmatpush1.msra.mxu0 %v28
    %134 = vmatprep.subr.mxu0 0.0
    %135 = vmatpush1.msra.mxu0 %v29
    %136 = vmatprep.subr.mxu0 0.0
    %137 = vmatpush1.msra.mxu0 %v30
    %138 = vmatprep.subr.mxu0 0.0
    %139 = vmatpush1.msra.mxu0 %v31
    %140 = vmatprep.subr.mxu0 0.0
    %141 = vmatpush1.msra.mxu0 0.0
    %142 = vmatprep.subr.mxu0 0.0
    %143 = vmatpush1.msra.mxu0 0.0
    %144 = vmatprep.subr.mxu0 0.0
    %145 = vmatpush1.msra.mxu0 0.0
    %146 = vmatprep.subr.mxu0 0.0
    %147 = vmatpush1.msra.mxu0 0.0
    %148 = vmatprep.subr.mxu0 0.0
    %149 = vmatpush1.msra.mxu0 0.0
    %150 = vmatprep.subr.mxu0 0.0
    %151 = vmatpush1.msra.mxu0 0.0
    %152 = vmatprep.subr.mxu0 0.0
    %153 = vmatpush1.msra.mxu0 0.0
    %154 = vmatprep.subr.mxu0 0.0
    %155 = vmatpush1.msra.mxu0 0.0
    %156 = vmatprep.subr.mxu0 0.0
    %157 = vmatpush1.msra.mxu0 0.0
    %158 = vmatprep.subr.mxu0 0.0
    %159 = vmatpush1.msra.mxu0 0.0
    %160 = vmatprep.subr.mxu0 0.0
    %161 = vmatpush1.msra.mxu0 0.0
    %162 = vmatprep.subr.mxu0 0.0
    %163 = vmatpush1.msra.mxu0 0.0
    %164 = vmatprep.subr.mxu0 0.0
    %165 = vmatpush1.msra.mxu0 0.0
    %166 = vmatprep.subr.mxu0 0.0
    %167 = vmatpush1.msra.mxu0 0.0
    %168 = vmatprep.subr.mxu0 0.0
    %169 = vmatpush1.msra.mxu0 0.0
    %170 = vmatprep.subr.mxu0 0.0
    %171 = vmatpush1.msra.mxu0 0.0
    %172 = vmatprep.subr.mxu0 0.0
    %173 = vmatpush1.msra.mxu0 0.0
    %174 = vmatprep.subr.mxu0 0.0
    %175 = vmatpush1.msra.mxu0 0.0
    %176 = vmatprep.subr.mxu0 0.0
    %177 = vmatpush1.msra.mxu0 0.0
    %178 = vmatprep.subr.mxu0 0.0
    %179 = vmatpush1.msra.mxu0 0.0
    %180 = vmatprep.subr.mxu0 0.0
    %181 = vmatpush1.msra.mxu0 0.0
    %182 = vmatprep.subr.mxu0 0.0
    %183 = vmatpush1.msra.mxu0 0.0
    %184 = vmatprep.subr.mxu0 0.0
    %185 = vmatpush1.msra.mxu0 0.0
    %186 = vmatprep.subr.mxu0 0.0
    %187 = vmatpush1.msra.mxu0 0.0
    %188 = vmatprep.subr.mxu0 0.0
    %189 = vmatpush1.msra.mxu0 0.0
    %190 = vmatprep.subr.mxu0 0.0
    %191 = vmatpush1.msra.mxu0 0.0
    %192 = vmatprep.subr.mxu0 0.0
    %193 = vmatpush1.msra.mxu0 0.0
    %194 = vmatprep.subr.mxu0 0.0
    %195 = vmatpush1.msra.mxu0 0.0
    %196 = vmatprep.mubr.f32.mxu0 0.0
    %197 = vmatmul.mubr.f32.gmra.mrb[0].mxu0 %v54
    %v198 = vpop.f32.mrb[0].mxu0
    %v199 = vadd.f32 %v130, %v198
    %v200 = vpop.f32.mrb[0].mxu0
    %201 = vdwg.mxu0
    %v203 = vlaneseq
    %v204 = vshrl.u32 %v203, 7
    %v205 = vsub.s32 0, %v204
    %v206 = vrot.slane %v41, %v205
    %208 = vmatprep.subr.mxu0 0.0
    %209 = vmatpush1.msra.mxu0 %v33
    %210 = vmatprep.subr.mxu0 0.0
    %211 = vmatpush1.msra.mxu0 %v34
    %212 = vmatprep.subr.mxu0 0.0
    %213 = vmatpush1.msra.mxu0 %v35
    %214 = vmatprep.subr.mxu0 0.0
    %215 = vmatpush1.msra.mxu0 %v36
    %216 = vmatprep.subr.mxu0 0.0
    %217 = vmatpush1.msra.mxu0 0.0
    %218 = vmatprep.subr.mxu0 0.0
    %219 = vmatpush1.msra.mxu0 0.0
    %220 = vmatprep.subr.mxu0 0.0
    %221 = vmatpush1.msra.mxu0 0.0
    %222 = vmatprep.subr.mxu0 0.0
    %223 = vmatpush1.msra.mxu0 0.0
    %224 = vmatprep.subr.mxu0 0.0
    %225 = vmatpush1.msra.mxu0 0.0
    %226 = vmatprep.subr.mxu0 0.0
    %227 = vmatpush1.msra.mxu0 0.0
    %228 = vmatprep.subr.mxu0 0.0
    %229 = vmatpush1.msra.mxu0 0.0
    %230 = vmatprep.subr.mxu0 0.0
    %231 = vmatpush1.msra.mxu0 0.0
    %232 = vmatprep.subr.mxu0 0.0
    %233 = vmatpush1.msra.mxu0 0.0
    %234 = vmatprep.subr.mxu0 0.0
    %235 = vmatpush1.msra.mxu0 0.0
    %236 = vmatprep.subr.mxu0 0.0
    %237 = vmatpush1.msra.mxu0 0.0
    %238 = vmatprep.subr.mxu0 0.0
    %239 = vmatpush1.msra.mxu0 0.0
    %240 = vmatprep.subr.mxu0 0.0
    %241 = vmatpush1.msra.mxu0 0.0
    %242 = vmatprep.subr.mxu0 0.0
    %243 = vmatpush1.msra.mxu0 0.0
    %244 = vmatprep.subr.mxu0 0.0
    %245 = vmatpush1.msra.mxu0 0.0
    %246 = vmatprep.subr.mxu0 0.0
    %247 = vmatpush1.msra.mxu0 0.0
    %248 = vmatprep.subr.mxu0 0.0
    %249 = vmatpush1.msra.mxu0 0.0
    %250 = vmatprep.subr.mxu0 0.0
    %251 = vmatpush1.msra.mxu0 0.0
    %252 = vmatprep.subr.mxu0 0.0
    %253 = vmatpush1.msra.mxu0 0.0
    %254 = vmatprep.subr.mxu0 0.0
    %255 = vmatpush1.msra.mxu0 0.0
    %256 = vmatprep.subr.mxu0 0.0
    %257 = vmatpush1.msra.mxu0 0.0
    %258 = vmatprep.subr.mxu0 0.0
    %259 = vmatpush1.msra.mxu0 0.0
    %260 = vmatprep.subr.mxu0 0.0
    %261 = vmatpush1.msra.mxu0 0.0
    %262 = vmatprep.subr.mxu0 0.0
    %263 = vmatpush1.msra.mxu0 0.0
    %264 = vmatprep.subr.mxu0 0.0
    %265 = vmatpush1.msra.mxu0 0.0
    %266 = vmatprep.subr.mxu0 0.0
    %267 = vmatpush1.msra.mxu0 0.0
    %268 = vmatprep.subr.mxu0 0.0
    %269 = vmatpush1.msra.mxu0 0.0
    %270 = vmatprep.subr.mxu0 0.0
    %271 = vmatpush1.msra.mxu0 0.0
    %272 = vmatprep.mubr.f32.mxu0 0.0
    %273 = vmatmul.mubr.f32.gmra.mrb[0].mxu0 %v54
    %v274 = vpop.f32.mrb[0].mxu0
    %v275 = vadd.f32 %v206, %v274
    %v276 = vpop.f32.mrb[0].mxu0
    %277 = vdwg.mxu0
    %v278 = vadd.f32 %v43, %v123
    %v279 = vxor.u32 %v278, 2147483648
    %v280 = vmul.f32 %v279, 1.442695
    %v281 = vpow.pop %v280
    %v282 = vadd.f32 %v281, 1.0
    %v283 = vrcp.pop %v282
    %v284 = vmul.f32 1.0, %v283
    %v285 = vadd.f32 %v44, %v199
    %v286 = vxor.u32 %v285, 2147483648
    %v287 = vmul.f32 %v286, 1.442695
    %v288 = vpow.pop %v287
    %v289 = vadd.f32 %v288, 1.0
    %v290 = vrcp.pop %v289
    %v291 = vmul.f32 1.0, %v290
    %v292 = vmul.f32 %v284, %v275
    %v293 = vadd.f32 %v45, %v292
    %v294 = vtanh.pop %v293
    %v295 = vsub.f32 1.0, %v291
    %v296 = vmul.f32 %v295, %v294
    %v297 = vmul.f32 %v291, %v42
    %v298 = vadd.f32 %v296, %v297
    %vm299 = vcmask 257024
    %300 = vst.msk [vmem:[#allocation2] sm:$0xf] %vm299, %v298
    %301 = vst.msk [vmem:[%s3] sm:$0xf] %vm299, %v298
    %v302 = vld [vmem:[#allocation2] sm:$0xf]
    %s303 = scalar_lea.vmem %s0, 12
    %v304 = vld [vmem:[%s303] sm:$0xf]
    %v305 = vld [vmem:[%s303 + $0x4] sm:$0xf]
    %v306 = vld [vmem:[%s303 + $0x8] sm:$0xf]
    %v308 = vsel %vm52, %v302, 0
    %310 = vmatprep.subr.mxu0 0.0
    %311 = vmatpush1.msra.mxu0 %v23
    %312 = vmatprep.subr.mxu0 0.0
    %313 = vmatpush1.msra.mxu0 %v24
    %314 = vmatprep.subr.mxu0 0.0
    %315 = vmatpush1.msra.mxu0 %v25
    %316 = vmatprep.subr.mxu0 0.0
    %317 = vmatpush1.msra.mxu0 %v26
    %318 = vmatprep.subr.mxu0 0.0
    %319 = vmatpush1.msra.mxu0 0.0
    %320 = vmatprep.subr.mxu0 0.0
    %321 = vmatpush1.msra.mxu0 0.0
    %322 = vmatprep.subr.mxu0 0.0
    %323 = vmatpush1.msra.mxu0 0.0
    %324 = vmatprep.subr.mxu0 0.0
    %325 = vmatpush1.msra.mxu0 0.0
    %326 = vmatprep.subr.mxu0 0.0
    %327 = vmatpush1.msra.mxu0 0.0
    %328 = vmatprep.subr.mxu0 0.0
    %329 = vmatpush1.msra.mxu0 0.0
    %330 = vmatprep.subr.mxu0 0.0
    %331 = vmatpush1.msra.mxu0 0.0
    %332 = vmatprep.subr.mxu0 0.0
    %333 = vmatpush1.msra.mxu0 0.0
    %334 = vmatprep.subr.mxu0 0.0
    %335 = vmatpush1.msra.mxu0 0.0
    %336 = vmatprep.subr.mxu0 0.0
    %337 = vmatpush1.msra.mxu0 0.0
    %338 = vmatprep.subr.mxu0 0.0
    %339 = vmatpush1.msra.mxu0 0.0
    %340 = vmatprep.subr.mxu0 0.0
    %341 = vmatpush1.msra.mxu0 0.0
    %342 = vmatprep.subr.mxu0 0.0
    %343 = vmatpush1.msra.mxu0 0.0
    %344 = vmatprep.subr.mxu0 0.0
    %345 = vmatpush1.msra.mxu0 0.0
    %346 = vmatprep.subr.mxu0 0.0
    %347 = vmatpush1.msra.mxu0 0.0
    %348 = vmatprep.subr.mxu0 0.0
    %349 = vmatpush1.msra.mxu0 0.0
    %350 = vmatprep.subr.mxu0 0.0
    %351 = vmatpush1.msra.mxu0 0.0
    %352 = vmatprep.subr.mxu0 0.0
    %353 = vmatpush1.msra.mxu0 0.0
    %354 = vmatprep.subr.mxu0 0.0
    %355 = vmatpush1.msra.mxu0 0.0
    %356 = vmatprep.subr.mxu0 0.0
    %357 = vmatpush1.msra.mxu0 0.0
    %358 = vmatprep.subr.mxu0 0.0
    %359 = vmatpush1.msra.mxu0 0.0
    %360 = vmatprep.subr.mxu0 0.0
    %361 = vmatpush1.msra.mxu0 0.0
    %362 = vmatprep.subr.mxu0 0.0
    %363 = vmatpush1.msra.mxu0 0.0
    %364 = vmatprep.subr.mxu0 0.0
    %365 = vmatpush1.msra.mxu0 0.0
    %366 = vmatprep.subr.mxu0 0.0
    %367 = vmatpush1.msra.mxu0 0.0
    %368 = vmatprep.subr.mxu0 0.0
    %369 = vmatpush1.msra.mxu0 0.0
    %370 = vmatprep.subr.mxu0 0.0
    %371 = vmatpush1.msra.mxu0 0.0
    %372 = vmatprep.subr.mxu0 0.0
    %373 = vmatpush1.msra.mxu0 0.0
    %374 = vmatprep.mubr.f32.mxu0 0.0
    %375 = vmatmul.mubr.f32.gmra.mrb[0].mxu0 %v308
    %v376 = vpop.f32.mrb[0].mxu0
    %v377 = vadd.f32 %v50, %v376
    %v378 = vpop.f32.mrb[0].mxu0
    %379 = vdwg.mxu0
    %380 = vmatprep.subr.mxu0 0.0
    %381 = vmatpush1.msra.mxu0 %v28
    %382 = vmatprep.subr.mxu0 0.0
    %383 = vmatpush1.msra.mxu0 %v29
    %384 = vmatprep.subr.mxu0 0.0
    %385 = vmatpush1.msra.mxu0 %v30
    %386 = vmatprep.subr.mxu0 0.0
    %387 = vmatpush1.msra.mxu0 %v31
    %388 = vmatprep.subr.mxu0 0.0
    %389 = vmatpush1.msra.mxu0 0.0
    %390 = vmatprep.subr.mxu0 0.0
    %391 = vmatpush1.msra.mxu0 0.0
    %392 = vmatprep.subr.mxu0 0.0
    %393 = vmatpush1.msra.mxu0 0.0
    %394 = vmatprep.subr.mxu0 0.0
    %395 = vmatpush1.msra.mxu0 0.0
    %396 = vmatprep.subr.mxu0 0.0
    %397 = vmatpush1.msra.mxu0 0.0
    %398 = vmatprep.subr.mxu0 0.0
    %399 = vmatpush1.msra.mxu0 0.0
    %400 = vmatprep.subr.mxu0 0.0
    %401 = vmatpush1.msra.mxu0 0.0
    %402 = vmatprep.subr.mxu0 0.0
    %403 = vmatpush1.msra.mxu0 0.0
    %404 = vmatprep.subr.mxu0 0.0
    %405 = vmatpush1.msra.mxu0 0.0
    %406 = vmatprep.subr.mxu0 0.0
    %407 = vmatpush1.msra.mxu0 0.0
    %408 = vmatprep.subr.mxu0 0.0
    %409 = vmatpush1.msra.mxu0 0.0
    %410 = vmatprep.subr.mxu0 0.0
    %411 = vmatpush1.msra.mxu0 0.0
    %412 = vmatprep.subr.mxu0 0.0
    %413 = vmatpush1.msra.mxu0 0.0
    %414 = vmatprep.subr.mxu0 0.0
    %415 = vmatpush1.msra.mxu0 0.0
    %416 = vmatprep.subr.mxu0 0.0
    %417 = vmatpush1.msra.mxu0 0.0
    %418 = vmatprep.subr.mxu0 0.0
    %419 = vmatpush1.msra.mxu0 0.0
    %420 = vmatprep.subr.mxu0 0.0
    %421 = vmatpush1.msra.mxu0 0.0
    %422 = vmatprep.subr.mxu0 0.0
    %423 = vmatpush1.msra.mxu0 0.0
    %424 = vmatprep.subr.mxu0 0.0
    %425 = vmatpush1.msra.mxu0 0.0
    %426 = vmatprep.subr.mxu0 0.0
    %427 = vmatpush1.msra.mxu0 0.0
    %428 = vmatprep.subr.mxu0 0.0
    %429 = vmatpush1.msra.mxu0 0.0
    %430 = vmatprep.subr.mxu0 0.0
    %431 = vmatpush1.msra.mxu0 0.0
    %432 = vmatprep.subr.mxu0 0.0
    %433 = vmatpush1.msra.mxu0 0.0
    %434 = vmatprep.subr.mxu0 0.0
    %435 = vmatpush1.msra.mxu0 0.0
    %436 = vmatprep.subr.mxu0 0.0
    %437 = vmatpush1.msra.mxu0 0.0
    %438 = vmatprep.subr.mxu0 0.0
    %439 = vmatpush1.msra.mxu0 0.0
    %440 = vmatprep.subr.mxu0 0.0
    %441 = vmatpush1.msra.mxu0 0.0
    %442 = vmatprep.subr.mxu0 0.0
    %443 = vmatpush1.msra.mxu0 0.0
    %444 = vmatprep.mubr.f32.mxu0 0.0
    %445 = vmatmul.mubr.f32.gmra.mrb[0].mxu0 %v308
    %v446 = vpop.f32.mrb[0].mxu0
    %v447 = vadd.f32 %v130, %v446
    %v448 = vpop.f32.mrb[0].mxu0
    %449 = vdwg.mxu0
    %450 = vmatprep.subr.mxu0 0.0
    %451 = vmatpush1.msra.mxu0 %v33
    %452 = vmatprep.subr.mxu0 0.0
    %453 = vmatpush1.msra.mxu0 %v34
    %454 = vmatprep.subr.mxu0 0.0
    %455 = vmatpush1.msra.mxu0 %v35
    %456 = vmatprep.subr.mxu0 0.0
    %457 = vmatpush1.msra.mxu0 %v36
    %458 = vmatprep.subr.mxu0 0.0
    %459 = vmatpush1.msra.mxu0 0.0
    %460 = vmatprep.subr.mxu0 0.0
    %461 = vmatpush1.msra.mxu0 0.0
    %462 = vmatprep.subr.mxu0 0.0
    %463 = vmatpush1.msra.mxu0 0.0
    %464 = vmatprep.subr.mxu0 0.0
    %465 = vmatpush1.msra.mxu0 0.0
    %466 = vmatprep.subr.mxu0 0.0
    %467 = vmatpush1.msra.mxu0 0.0
    %468 = vmatprep.subr.mxu0 0.0
    %469 = vmatpush1.msra.mxu0 0.0
    %470 = vmatprep.subr.mxu0 0.0
    %471 = vmatpush1.msra.mxu0 0.0
    %472 = vmatprep.subr.mxu0 0.0
    %473 = vmatpush1.msra.mxu0 0.0
    %474 = vmatprep.subr.mxu0 0.0
    %475 = vmatpush1.msra.mxu0 0.0
    %476 = vmatprep.subr.mxu0 0.0
    %477 = vmatpush1.msra.mxu0 0.0
    %478 = vmatprep.subr.mxu0 0.0
    %479 = vmatpush1.msra.mxu0 0.0
    %480 = vmatprep.subr.mxu0 0.0
    %481 = vmatpush1.msra.mxu0 0.0
    %482 = vmatprep.subr.mxu0 0.0
    %483 = vmatpush1.msra.mxu0 0.0
    %484 = vmatprep.subr.mxu0 0.0
    %485 = vmatpush1.msra.mxu0 0.0
    %486 = vmatprep.subr.mxu0 0.0
    %487 = vmatpush1.msra.mxu0 0.0
    %488 = vmatprep.subr.mxu0 0.0
    %489 = vmatpush1.msra.mxu0 0.0
    %490 = vmatprep.subr.mxu0 0.0
    %491 = vmatpush1.msra.mxu0 0.0
    %492 = vmatprep.subr.mxu0 0.0
    %493 = vmatpush1.msra.mxu0 0.0
    %494 = vmatprep.subr.mxu0 0.0
    %495 = vmatpush1.msra.mxu0 0.0
    %496 = vmatprep.subr.mxu0 0.0
    %497 = vmatpush1.msra.mxu0 0.0
    %498 = vmatprep.subr.mxu0 0.0
    %499 = vmatpush1.msra.mxu0 0.0
    %500 = vmatprep.subr.mxu0 0.0
    %501 = vmatpush1.msra.mxu0 0.0
    %502 = vmatprep.subr.mxu0 0.0
    %503 = vmatpush1.msra.mxu0 0.0
    %504 = vmatprep.subr.mxu0 0.0
    %505 = vmatpush1.msra.mxu0 0.0
    %506 = vmatprep.subr.mxu0 0.0
    %507 = vmatpush1.msra.mxu0 0.0
    %508 = vmatprep.subr.mxu0 0.0
    %509 = vmatpush1.msra.mxu0 0.0
    %510 = vmatprep.subr.mxu0 0.0
    %511 = vmatpush1.msra.mxu0 0.0
    %512 = vmatprep.subr.mxu0 0.0
    %513 = vmatpush1.msra.mxu0 0.0
    %514 = vmatprep.mubr.f32.mxu0 0.0
    %515 = vmatmul.mubr.f32.gmra.mrb[0].mxu0 %v308
    %v516 = vpop.f32.mrb[0].mxu0
    %v517 = vadd.f32 %v206, %v516
    %v518 = vpop.f32.mrb[0].mxu0
    %519 = vdwg.mxu0
    %v520 = vadd.f32 %v304, %v377
    %v521 = vxor.u32 %v520, 2147483648
    %v522 = vmul.f32 %v521, 1.442695
    %v523 = vpow.pop %v522
    %v524 = vadd.f32 %v523, 1.0
    %v525 = vrcp.pop %v524
    %v526 = vmul.f32 1.0, %v525
    %v527 = vadd.f32 %v305, %v447
    %v528 = vxor.u32 %v527, 2147483648
    %v529 = vmul.f32 %v528, 1.442695
    %v530 = vpow.pop %v529
    %v531 = vadd.f32 %v530, 1.0
    %v532 = vrcp.pop %v531
    %v533 = vmul.f32 1.0, %v532
    %v534 = vmul.f32 %v526, %v517
    %v535 = vadd.f32 %v306, %v534
    %v536 = vtanh.pop %v535
    %v537 = vsub.f32 1.0, %v533
    %v538 = vmul.f32 %v537, %v536
    %v539 = vmul.f32 %v533, %v302
    %v540 = vadd.f32 %v538, %v539
    %541 = vst.msk [vmem:[#allocation2] sm:$0xf] %vm299, %v540
    %s542 = scalar_lea.vmem %s3, 4
    %543 = vst.msk [vmem:[%s542] sm:$0xf] %vm299, %v540
    %v544 = vld [vmem:[#allocation2] sm:$0xf]
    %s545 = scalar_lea.vmem %s0, 24
    %v546 = vld [vmem:[%s545] sm:$0xf]
    %v547 = vld [vmem:[%s545 + $0x4] sm:$0xf]
    %v548 = vld [vmem:[%s545 + $0x8] sm:$0xf]
    %v550 = vsel %vm52, %v544, 0
    %552 = vmatprep.subr.mxu0 0.0
    %553 = vmatpush1.msra.mxu0 %v23
    %554 = vmatprep.subr.mxu0 0.0
    %555 = vmatpush1.msra.mxu0 %v24
    %556 = vmatprep.subr.mxu0 0.0
    %557 = vmatpush1.msra.mxu0 %v25
    %558 = vmatprep.subr.mxu0 0.0
    %559 = vmatpush1.msra.mxu0 %v26
    %560 = vmatprep.subr.mxu0 0.0
    %561 = vmatpush1.msra.mxu0 0.0
    %562 = vmatprep.subr.mxu0 0.0
    %563 = vmatpush1.msra.mxu0 0.0
    %564 = vmatprep.subr.mxu0 0.0
    %565 = vmatpush1.msra.mxu0 0.0
    %566 = vmatprep.subr.mxu0 0.0
    %567 = vmatpush1.msra.mxu0 0.0
    %568 = vmatprep.subr.mxu0 0.0
    %569 = vmatpush1.msra.mxu0 0.0
    %570 = vmatprep.subr.mxu0 0.0
    %571 = vmatpush1.msra.mxu0 0.0
    %572 = vmatprep.subr.mxu0 0.0
    %573 = vmatpush1.msra.mxu0 0.0
    %574 = vmatprep.subr.mxu0 0.0
    %575 = vmatpush1.msra.mxu0 0.0
    %576 = vmatprep.subr.mxu0 0.0
    %577 = vmatpush1.msra.mxu0 0.0
    %578 = vmatprep.subr.mxu0 0.0
    %579 = vmatpush1.msra.mxu0 0.0
    %580 = vmatprep.subr.mxu0 0.0
    %581 = vmatpush1.msra.mxu0 0.0
    %582 = vmatprep.subr.mxu0 0.0
    %583 = vmatpush1.msra.mxu0 0.0
    %584 = vmatprep.subr.mxu0 0.0
    %585 = vmatpush1.msra.mxu0 0.0
    %586 = vmatprep.subr.mxu0 0.0
    %587 = vmatpush1.msra.mxu0 0.0
    %588 = vmatprep.subr.mxu0 0.0
    %589 = vmatpush1.msra.mxu0 0.0
    %590 = vmatprep.subr.mxu0 0.0
    %591 = vmatpush1.msra.mxu0 0.0
    %592 = vmatprep.subr.mxu0 0.0
    %593 = vmatpush1.msra.mxu0 0.0
    %594 = vmatprep.subr.mxu0 0.0
    %595 = vmatpush1.msra.mxu0 0.0
    %596 = vmatprep.subr.mxu0 0.0
    %597 = vmatpush1.msra.mxu0 0.0
    %598 = vmatprep.subr.mxu0 0.0
    %599 = vmatpush1.msra.mxu0 0.0
    %600 = vmatprep.subr.mxu0 0.0
    %601 = vmatpush1.msra.mxu0 0.0
    %602 = vmatprep.subr.mxu0 0.0
    %603 = vmatpush1.msra.mxu0 0.0
    %604 = vmatprep.subr.mxu0 0.0
    %605 = vmatpush1.msra.mxu0 0.0
    %606 = vmatprep.subr.mxu0 0.0
    %607 = vmatpush1.msra.mxu0 0.0
    %608 = vmatprep.subr.mxu0 0.0
    %609 = vmatpush1.msra.mxu0 0.0
    %610 = vmatprep.subr.mxu0 0.0
    %611 = vmatpush1.msra.mxu0 0.0
    %612 = vmatprep.subr.mxu0 0.0
    %613 = vmatpush1.msra.mxu0 0.0
    %614 = vmatprep.subr.mxu0 0.0
    %615 = vmatpush1.msra.mxu0 0.0
    %616 = vmatprep.mubr.f32.mxu0 0.0
    %617 = vmatmul.mubr.f32.gmra.mrb[0].mxu0 %v550
    %v618 = vpop.f32.mrb[0].mxu0
    %v619 = vadd.f32 %v50, %v618
    %v620 = vpop.f32.mrb[0].mxu0
    %621 = vdwg.mxu0
    %622 = vmatprep.subr.mxu0 0.0
    %623 = vmatpush1.msra.mxu0 %v28
    %624 = vmatprep.subr.mxu0 0.0
    %625 = vmatpush1.msra.mxu0 %v29
    %626 = vmatprep.subr.mxu0 0.0
    %627 = vmatpush1.msra.mxu0 %v30
    %628 = vmatprep.subr.mxu0 0.0
    %629 = vmatpush1.msra.mxu0 %v31
    %630 = vmatprep.subr.mxu0 0.0
    %631 = vmatpush1.msra.mxu0 0.0
    %632 = vmatprep.subr.mxu0 0.0
    %633 = vmatpush1.msra.mxu0 0.0
    %634 = vmatprep.subr.mxu0 0.0
    %635 = vmatpush1.msra.mxu0 0.0
    %636 = vmatprep.subr.mxu0 0.0
    %637 = vmatpush1.msra.mxu0 0.0
    %638 = vmatprep.subr.mxu0 0.0
    %639 = vmatpush1.msra.mxu0 0.0
    %640 = vmatprep.subr.mxu0 0.0
    %641 = vmatpush1.msra.mxu0 0.0
    %642 = vmatprep.subr.mxu0 0.0
    %643 = vmatpush1.msra.mxu0 0.0
    %644 = vmatprep.subr.mxu0 0.0
    %645 = vmatpush1.msra.mxu0 0.0
    %646 = vmatprep.subr.mxu0 0.0
    %647 = vmatpush1.msra.mxu0 0.0
    %648 = vmatprep.subr.mxu0 0.0
    %649 = vmatpush1.msra.mxu0 0.0
    %650 = vmatprep.subr.mxu0 0.0
    %651 = vmatpush1.msra.mxu0 0.0
    %652 = vmatprep.subr.mxu0 0.0
    %653 = vmatpush1.msra.mxu0 0.0
    %654 = vmatprep.subr.mxu0 0.0
    %655 = vmatpush1.msra.mxu0 0.0
    %656 = vmatprep.subr.mxu0 0.0
    %657 = vmatpush1.msra.mxu0 0.0
    %658 = vmatprep.subr.mxu0 0.0
    %659 = vmatpush1.msra.mxu0 0.0
    %660 = vmatprep.subr.mxu0 0.0
    %661 = vmatpush1.msra.mxu0 0.0
    %662 = vmatprep.subr.mxu0 0.0
    %663 = vmatpush1.msra.mxu0 0.0
    %664 = vmatprep.subr.mxu0 0.0
    %665 = vmatpush1.msra.mxu0 0.0
    %666 = vmatprep.subr.mxu0 0.0
    %667 = vmatpush1.msra.mxu0 0.0
    %668 = vmatprep.subr.mxu0 0.0
    %669 = vmatpush1.msra.mxu0 0.0
    %670 = vmatprep.subr.mxu0 0.0
    %671 = vmatpush1.msra.mxu0 0.0
    %672 = vmatprep.subr.mxu0 0.0
    %673 = vmatpush1.msra.mxu0 0.0
    %674 = vmatprep.subr.mxu0 0.0
    %675 = vmatpush1.msra.mxu0 0.0
    %676 = vmatprep.subr.mxu0 0.0
    %677 = vmatpush1.msra.mxu0 0.0
    %678 = vmatprep.subr.mxu0 0.0
    %679 = vmatpush1.msra.mxu0 0.0
    %680 = vmatprep.subr.mxu0 0.0
    %681 = vmatpush1.msra.mxu0 0.0
    %682 = vmatprep.subr.mxu0 0.0
    %683 = vmatpush1.msra.mxu0 0.0
    %684 = vmatprep.subr.mxu0 0.0
    %685 = vmatpush1.msra.mxu0 0.0
    %686 = vmatprep.mubr.f32.mxu0 0.0
    %687 = vmatmul.mubr.f32.gmra.mrb[0].mxu0 %v550
    %v688 = vpop.f32.mrb[0].mxu0
    %v689 = vadd.f32 %v130, %v688
    %v690 = vpop.f32.mrb[0].mxu0
    %691 = vdwg.mxu0
    %692 = vmatprep.subr.mxu0 0.0
    %693 = vmatpush1.msra.mxu0 %v33
    %694 = vmatprep.subr.mxu0 0.0
    %695 = vmatpush1.msra.mxu0 %v34
    %696 = vmatprep.subr.mxu0 0.0
    %697 = vmatpush1.msra.mxu0 %v35
    %698 = vmatprep.subr.mxu0 0.0
    %699 = vmatpush1.msra.mxu0 %v36
    %700 = vmatprep.subr.mxu0 0.0
    %701 = vmatpush1.msra.mxu0 0.0
    %702 = vmatprep.subr.mxu0 0.0
    %703 = vmatpush1.msra.mxu0 0.0
    %704 = vmatprep.subr.mxu0 0.0
    %705 = vmatpush1.msra.mxu0 0.0
    %706 = vmatprep.subr.mxu0 0.0
    %707 = vmatpush1.msra.mxu0 0.0
    %708 = vmatprep.subr.mxu0 0.0
    %709 = vmatpush1.msra.mxu0 0.0
    %710 = vmatprep.subr.mxu0 0.0
    %711 = vmatpush1.msra.mxu0 0.0
    %712 = vmatprep.subr.mxu0 0.0
    %713 = vmatpush1.msra.mxu0 0.0
    %714 = vmatprep.subr.mxu0 0.0
    %715 = vmatpush1.msra.mxu0 0.0
    %716 = vmatprep.subr.mxu0 0.0
    %717 = vmatpush1.msra.mxu0 0.0
    %718 = vmatprep.subr.mxu0 0.0
    %719 = vmatpush1.msra.mxu0 0.0
    %720 = vmatprep.subr.mxu0 0.0
    %721 = vmatpush1.msra.mxu0 0.0
    %722 = vmatprep.subr.mxu0 0.0
    %723 = vmatpush1.msra.mxu0 0.0
    %724 = vmatprep.subr.mxu0 0.0
    %725 = vmatpush1.msra.mxu0 0.0
    %726 = vmatprep.subr.mxu0 0.0
    %727 = vmatpush1.msra.mxu0 0.0
    %728 = vmatprep.subr.mxu0 0.0
    %729 = vmatpush1.msra.mxu0 0.0
    %730 = vmatprep.subr.mxu0 0.0
    %731 = vmatpush1.msra.mxu0 0.0
    %732 = vmatprep.subr.mxu0 0.0
    %733 = vmatpush1.msra.mxu0 0.0
    %734 = vmatprep.subr.mxu0 0.0
    %735 = vmatpush1.msra.mxu0 0.0
    %736 = vmatprep.subr.mxu0 0.0
    %737 = vmatpush1.msra.mxu0 0.0
    %738 = vmatprep.subr.mxu0 0.0
    %739 = vmatpush1.msra.mxu0 0.0
    %740 = vmatprep.subr.mxu0 0.0
    %741 = vmatpush1.msra.mxu0 0.0
    %742 = vmatprep.subr.mxu0 0.0
    %743 = vmatpush1.msra.mxu0 0.0
    %744 = vmatprep.subr.mxu0 0.0
    %745 = vmatpush1.msra.mxu0 0.0
    %746 = vmatprep.subr.mxu0 0.0
    %747 = vmatpush1.msra.mxu0 0.0
    %748 = vmatprep.subr.mxu0 0.0
    %749 = vmatpush1.msra.mxu0 0.0
    %750 = vmatprep.subr.mxu0 0.0
    %751 = vmatpush1.msra.mxu0 0.0
    %752 = vmatprep.subr.mxu0 0.0
    %753 = vmatpush1.msra.mxu0 0.0
    %754 = vmatprep.subr.mxu0 0.0
    %755 = vmatpush1.msra.mxu0 0.0
    %756 = vmatprep.mubr.f32.mxu0 0.0
    %757 = vmatmul.mubr.f32.gmra.mrb[0].mxu0 %v550
    %v758 = vpop.f32.mrb[0].mxu0
    %v759 = vadd.f32 %v206, %v758
    %v760 = vpop.f32.mrb[0].mxu0
    %761 = vdwg.mxu0
    %v762 = vadd.f32 %v546, %v619
    %v763 = vxor.u32 %v762, 2147483648
    %v764 = vmul.f32 %v763, 1.442695
    %v765 = vpow.pop %v764
    %v766 = vadd.f32 %v765, 1.0
    %v767 = vrcp.pop %v766
    %v768 = vmul.f32 1.0, %v767
    %v769 = vadd.f32 %v547, %v689
    %v770 = vxor.u32 %v769, 2147483648
    %v771 = vmul.f32 %v770, 1.442695
    %v772 = vpow.pop %v771
    %v773 = vadd.f32 %v772, 1.0
    %v774 = vrcp.pop %v773
    %v775 = vmul.f32 1.0, %v774
    %v776 = vmul.f32 %v768, %v759
    %v777 = vadd.f32 %v548, %v776
    %v778 = vtanh.pop %v777
    %v779 = vsub.f32 1.0, %v775
    %v780 = vmul.f32 %v779, %v778
    %v781 = vmul.f32 %v775, %v544
    %v782 = vadd.f32 %v780, %v781
    %783 = vst.msk [vmem:[#allocation2] sm:$0xf] %vm299, %v782
    %s784 = scalar_lea.vmem %s3, 8
    %785 = vst.msk [vmem:[%s784] sm:$0xf] %vm299, %v782
    %v786 = vld [vmem:[#allocation2] sm:$0xf]
    %s787 = scalar_lea.vmem %s0, 36
    %v788 = vld [vmem:[%s787] sm:$0xf]
    %v789 = vld [vmem:[%s787 + $0x4] sm:$0xf]
    %v790 = vld [vmem:[%s787 + $0x8] sm:$0xf]
    %v792 = vsel %vm52, %v786, 0
    %794 = vmatprep.subr.mxu0 0.0
    %795 = vmatpush1.msra.mxu0 %v23
    %796 = vmatprep.subr.mxu0 0.0
    %797 = vmatpush1.msra.mxu0 %v24
    %798 = vmatprep.subr.mxu0 0.0
    %799 = vmatpush1.msra.mxu0 %v25
    %800 = vmatprep.subr.mxu0 0.0
    %801 = vmatpush1.msra.mxu0 %v26
    %802 = vmatprep.subr.mxu0 0.0
    %803 = vmatpush1.msra.mxu0 0.0
    %804 = vmatprep.subr.mxu0 0.0
    %805 = vmatpush1.msra.mxu0 0.0
    %806 = vmatprep.subr.mxu0 0.0
    %807 = vmatpush1.msra.mxu0 0.0
    %808 = vmatprep.subr.mxu0 0.0
    %809 = vmatpush1.msra.mxu0 0.0
    %810 = vmatprep.subr.mxu0 0.0
    %811 = vmatpush1.msra.mxu0 0.0
    %812 = vmatprep.subr.mxu0 0.0
    %813 = vmatpush1.msra.mxu0 0.0
    %814 = vmatprep.subr.mxu0 0.0
    %815 = vmatpush1.msra.mxu0 0.0
    %816 = vmatprep.subr.mxu0 0.0
    %817 = vmatpush1.msra.mxu0 0.0
    %818 = vmatprep.subr.mxu0 0.0
    %819 = vmatpush1.msra.mxu0 0.0
    %820 = vmatprep.subr.mxu0 0.0
    %821 = vmatpush1.msra.mxu0 0.0
    %822 = vmatprep.subr.mxu0 0.0
    %823 = vmatpush1.msra.mxu0 0.0
    %824 = vmatprep.subr.mxu0 0.0
    %825 = vmatpush1.msra.mxu0 0.0
    %826 = vmatprep.subr.mxu0 0.0
    %827 = vmatpush1.msra.mxu0 0.0
    %828 = vmatprep.subr.mxu0 0.0
    %829 = vmatpush1.msra.mxu0 0.0
    %830 = vmatprep.subr.mxu0 0.0
    %831 = vmatpush1.msra.mxu0 0.0
    %832 = vmatprep.subr.mxu0 0.0
    %833 = vmatpush1.msra.mxu0 0.0
    %834 = vmatprep.subr.mxu0 0.0
    %835 = vmatpush1.msra.mxu0 0.0
    %836 = vmatprep.subr.mxu0 0.0
    %837 = vmatpush1.msra.mxu0 0.0
    %838 = vmatprep.subr.mxu0 0.0
    %839 = vmatpush1.msra.mxu0 0.0
    %840 = vmatprep.subr.mxu0 0.0
    %841 = vmatpush1.msra.mxu0 0.0
    %842 = vmatprep.subr.mxu0 0.0
    %843 = vmatpush1.msra.mxu0 0.0
    %844 = vmatprep.subr.mxu0 0.0
    %845 = vmatpush1.msra.mxu0 0.0
    %846 = vmatprep.subr.mxu0 0.0
    %847 = vmatpush1.msra.mxu0 0.0
    %848 = vmatprep.subr.mxu0 0.0
    %849 = vmatpush1.msra.mxu0 0.0
    %850 = vmatprep.subr.mxu0 0.0
    %851 = vmatpush1.msra.mxu0 0.0
    %852 = vmatprep.subr.mxu0 0.0
    %853 = vmatpush1.msra.mxu0 0.0
    %854 = vmatprep.subr.mxu0 0.0
    %855 = vmatpush1.msra.mxu0 0.0
    %856 = vmatprep.subr.mxu0 0.0
    %857 = vmatpush1.msra.mxu0 0.0
    %858 = vmatprep.mubr.f32.mxu0 0.0
    %859 = vmatmul.mubr.f32.gmra.mrb[0].mxu0 %v792
    %v860 = vpop.f32.mrb[0].mxu0
    %v861 = vadd.f32 %v50, %v860
    %v862 = vpop.f32.mrb[0].mxu0
    %863 = vdwg.mxu0
    %864 = vmatprep.subr.mxu0 0.0
    %865 = vmatpush1.msra.mxu0 %v28
    %866 = vmatprep.subr.mxu0 0.0
    %867 = vmatpush1.msra.mxu0 %v29
    %868 = vmatprep.subr.mxu0 0.0
    %869 = vmatpush1.msra.mxu0 %v30
    %870 = vmatprep.subr.mxu0 0.0
    %871 = vmatpush1.msra.mxu0 %v31
    %872 = vmatprep.subr.mxu0 0.0
    %873 = vmatpush1.msra.mxu0 0.0
    %874 = vmatprep.subr.mxu0 0.0
    %875 = vmatpush1.msra.mxu0 0.0
    %876 = vmatprep.subr.mxu0 0.0
    %877 = vmatpush1.msra.mxu0 0.0
    %878 = vmatprep.subr.mxu0 0.0
    %879 = vmatpush1.msra.mxu0 0.0
    %880 = vmatprep.subr.mxu0 0.0
    %881 = vmatpush1.msra.mxu0 0.0
    %882 = vmatprep.subr.mxu0 0.0
    %883 = vmatpush1.msra.mxu0 0.0
    %884 = vmatprep.subr.mxu0 0.0
    %885 = vmatpush1.msra.mxu0 0.0
    %886 = vmatprep.subr.mxu0 0.0
    %887 = vmatpush1.msra.mxu0 0.0
    %888 = vmatprep.subr.mxu0 0.0
    %889 = vmatpush1.msra.mxu0 0.0
    %890 = vmatprep.subr.mxu0 0.0
    %891 = vmatpush1.msra.mxu0 0.0
    %892 = vmatprep.subr.mxu0 0.0
    %893 = vmatpush1.msra.mxu0 0.0
    %894 = vmatprep.subr.mxu0 0.0
    %895 = vmatpush1.msra.mxu0 0.0
    %896 = vmatprep.subr.mxu0 0.0
    %897 = vmatpush1.msra.mxu0 0.0
    %898 = vmatprep.subr.mxu0 0.0
    %899 = vmatpush1.msra.mxu0 0.0
    %900 = vmatprep.subr.mxu0 0.0
    %901 = vmatpush1.msra.mxu0 0.0
    %902 = vmatprep.subr.mxu0 0.0
    %903 = vmatpush1.msra.mxu0 0.0
    %904 = vmatprep.subr.mxu0 0.0
    %905 = vmatpush1.msra.mxu0 0.0
    %906 = vmatprep.subr.mxu0 0.0
    %907 = vmatpush1.msra.mxu0 0.0
    %908 = vmatprep.subr.mxu0 0.0
    %909 = vmatpush1.msra.mxu0 0.0
    %910 = vmatprep.subr.mxu0 0.0
    %911 = vmatpush1.msra.mxu0 0.0
    %912 = vmatprep.subr.mxu0 0.0
    %913 = vmatpush1.msra.mxu0 0.0
    %914 = vmatprep.subr.mxu0 0.0
    %915 = vmatpush1.msra.mxu0 0.0
    %916 = vmatprep.subr.mxu0 0.0
    %917 = vmatpush1.msra.mxu0 0.0
    %918 = vmatprep.subr.mxu0 0.0
    %919 = vmatpush1.msra.mxu0 0.0
    %920 = vmatprep.subr.mxu0 0.0
    %921 = vmatpush1.msra.mxu0 0.0
    %922 = vmatprep.subr.mxu0 0.0
    %923 = vmatpush1.msra.mxu0 0.0
    %924 = vmatprep.subr.mxu0 0.0
    %925 = vmatpush1.msra.mxu0 0.0
    %926 = vmatprep.subr.mxu0 0.0
    %927 = vmatpush1.msra.mxu0 0.0
    %928 = vmatprep.mubr.f32.mxu0 0.0
    %929 = vmatmul.mubr.f32.gmra.mrb[0].mxu0 %v792
    %v930 = vpop.f32.mrb[0].mxu0
    %v931 = vadd.f32 %v130, %v930
    %v932 = vpop.f32.mrb[0].mxu0
    %933 = vdwg.mxu0
    %934 = vmatprep.subr.mxu0 0.0
    %935 = vmatpush1.msra.mxu0 %v33
    %936 = vmatprep.subr.mxu0 0.0
    %937 = vmatpush1.msra.mxu0 %v34
    %938 = vmatprep.subr.mxu0 0.0
    %939 = vmatpush1.msra.mxu0 %v35
    %940 = vmatprep.subr.mxu0 0.0
    %941 = vmatpush1.msra.mxu0 %v36
    %942 = vmatprep.subr.mxu0 0.0
    %943 = vmatpush1.msra.mxu0 0.0
    %944 = vmatprep.subr.mxu0 0.0
    %945 = vmatpush1.msra.mxu0 0.0
    %946 = vmatprep.subr.mxu0 0.0
    %947 = vmatpush1.msra.mxu0 0.0
    %948 = vmatprep.subr.mxu0 0.0
    %949 = vmatpush1.msra.mxu0 0.0
    %950 = vmatprep.subr.mxu0 0.0
    %951 = vmatpush1.msra.mxu0 0.0
    %952 = vmatprep.subr.mxu0 0.0
    %953 = vmatpush1.msra.mxu0 0.0
    %954 = vmatprep.subr.mxu0 0.0
    %955 = vmatpush1.msra.mxu0 0.0
    %956 = vmatprep.subr.mxu0 0.0
    %957 = vmatpush1.msra.mxu0 0.0
    %958 = vmatprep.subr.mxu0 0.0
    %959 = vmatpush1.msra.mxu0 0.0
    %960 = vmatprep.subr.mxu0 0.0
    %961 = vmatpush1.msra.mxu0 0.0
    %962 = vmatprep.subr.mxu0 0.0
    %963 = vmatpush1.msra.mxu0 0.0
    %964 = vmatprep.subr.mxu0 0.0
    %965 = vmatpush1.msra.mxu0 0.0
    %966 = vmatprep.subr.mxu0 0.0
    %967 = vmatpush1.msra.mxu0 0.0
    %968 = vmatprep.subr.mxu0 0.0
    %969 = vmatpush1.msra.mxu0 0.0
    %970 = vmatprep.subr.mxu0 0.0
    %971 = vmatpush1.msra.mxu0 0.0
    %972 = vmatprep.subr.mxu0 0.0
    %973 = vmatpush1.msra.mxu0 0.0
    %974 = vmatprep.subr.mxu0 0.0
    %975 = vmatpush1.msra.mxu0 0.0
    %976 = vmatprep.subr.mxu0 0.0
    %977 = vmatpush1.msra.mxu0 0.0
    %978 = vmatprep.subr.mxu0 0.0
    %979 = vmatpush1.msra.mxu0 0.0
    %980 = vmatprep.subr.mxu0 0.0
    %981 = vmatpush1.msra.mxu0 0.0
    %982 = vmatprep.subr.mxu0 0.0
    %983 = vmatpush1.msra.mxu0 0.0
    %984 = vmatprep.subr.mxu0 0.0
    %985 = vmatpush1.msra.mxu0 0.0
    %986 = vmatprep.subr.mxu0 0.0
    %987 = vmatpush1.msra.mxu0 0.0
    %988 = vmatprep.subr.mxu0 0.0
    %989 = vmatpush1.msra.mxu0 0.0
    %990 = vmatprep.subr.mxu0 0.0
    %991 = vmatpush1.msra.mxu0 0.0
    %992 = vmatprep.subr.mxu0 0.0
    %993 = vmatpush1.msra.mxu0 0.0
    %994 = vmatprep.subr.mxu0 0.0
    %995 = vmatpush1.msra.mxu0 0.0
    %996 = vmatprep.subr.mxu0 0.0
    %997 = vmatpush1.msra.mxu0 0.0
    %998 = vmatprep.mubr.f32.mxu0 0.0
    %999 = vmatmul.mubr.f32.gmra.mrb[0].mxu0 %v792
    %v1000 = vpop.f32.mrb[0].mxu0
    %v1001 = vadd.f32 %v206, %v1000
    %v1002 = vpop.f32.mrb[0].mxu0
    %1003 = vdwg.mxu0
    %v1004 = vadd.f32 %v788, %v861
    %v1005 = vxor.u32 %v1004, 2147483648
    %v1006 = vmul.f32 %v1005, 1.442695
    %v1007 = vpow.pop %v1006
    %v1008 = vadd.f32 %v1007, 1.0
    %v1009 = vrcp.pop %v1008
    %v1010 = vmul.f32 1.0, %v1009
    %v1011 = vadd.f32 %v789, %v931
    %v1012 = vxor.u32 %v1011, 2147483648
    %v1013 = vmul.f32 %v1012, 1.442695
    %v1014 = vpow.pop %v1013
    %v1015 = vadd.f32 %v1014, 1.0
    %v1016 = vrcp.pop %v1015
    %v1017 = vmul.f32 1.0, %v1016
    %v1018 = vmul.f32 %v1010, %v1001
    %v1019 = vadd.f32 %v790, %v1018
    %v1020 = vtanh.pop %v1019
    %v1021 = vsub.f32 1.0, %v1017
    %v1022 = vmul.f32 %v1021, %v1020
    %v1023 = vmul.f32 %v1017, %v786
    %v1024 = vadd.f32 %v1022, %v1023
    %1025 = vst.msk [vmem:[#allocation2] sm:$0xf] %vm299, %v1024
    %s1026 = scalar_lea.vmem %s3, 12
    %1027 = vst.msk [vmem:[%s1026] sm:$0xf] %vm299, %v1024
    %v1028 = vld [vmem:[#allocation2] sm:$0xf]
    %s1029 = scalar_lea.vmem %s0, 48
    %v1030 = vld [vmem:[%s1029] sm:$0xf]
    %v1031 = vld [vmem:[%s1029 + $0x4] sm:$0xf]
    %v1032 = vld [vmem:[%s1029 + $0x8] sm:$0xf]
    %v1034 = vsel %vm52, %v1028, 0
    %1036 = vmatprep.subr.mxu0 0.0
    %1037 = vmatpush1.msra.mxu0 %v23
    %1038 = vmatprep.subr.mxu0 0.0
    %1039 = vmatpush1.msra.mxu0 %v24
    %1040 = vmatprep.subr.mxu0 0.0
    %1041 = vmatpush1.msra.mxu0 %v25
    %1042 = vmatprep.subr.mxu0 0.0
    %1043 = vmatpush1.msra.mxu0 %v26
    %1044 = vmatprep.subr.mxu0 0.0
    %1045 = vmatpush1.msra.mxu0 0.0
    %1046 = vmatprep.subr.mxu0 0.0
    %1047 = vmatpush1.msra.mxu0 0.0
    %1048 = vmatprep.subr.mxu0 0.0
    %1049 = vmatpush1.msra.mxu0 0.0
    %1050 = vmatprep.subr.mxu0 0.0
    %1051 = vmatpush1.msra.mxu0 0.0
    %1052 = vmatprep.subr.mxu0 0.0
    %1053 = vmatpush1.msra.mxu0 0.0
    %1054 = vmatprep.subr.mxu0 0.0
    %1055 = vmatpush1.msra.mxu0 0.0
    %1056 = vmatprep.subr.mxu0 0.0
    %1057 = vmatpush1.msra.mxu0 0.0
    %1058 = vmatprep.subr.mxu0 0.0
    %1059 = vmatpush1.msra.mxu0 0.0
    %1060 = vmatprep.subr.mxu0 0.0
    %1061 = vmatpush1.msra.mxu0 0.0
    %1062 = vmatprep.subr.mxu0 0.0
    %1063 = vmatpush1.msra.mxu0 0.0
    %1064 = vmatprep.subr.mxu0 0.0
    %1065 = vmatpush1.msra.mxu0 0.0
    %1066 = vmatprep.subr.mxu0 0.0
    %1067 = vmatpush1.msra.mxu0 0.0
    %1068 = vmatprep.subr.mxu0 0.0
    %1069 = vmatpush1.msra.mxu0 0.0
    %1070 = vmatprep.subr.mxu0 0.0
    %1071 = vmatpush1.msra.mxu0 0.0
    %1072 = vmatprep.subr.mxu0 0.0
    %1073 = vmatpush1.msra.mxu0 0.0
    %1074 = vmatprep.subr.mxu0 0.0
    %1075 = vmatpush1.msra.mxu0 0.0
    %1076 = vmatprep.subr.mxu0 0.0
    %1077 = vmatpush1.msra.mxu0 0.0
    %1078 = vmatprep.subr.mxu0 0.0
    %1079 = vmatpush1.msra.mxu0 0.0
    %1080 = vmatprep.subr.mxu0 0.0
    %1081 = vmatpush1.msra.mxu0 0.0
    %1082 = vmatprep.subr.mxu0 0.0
    %1083 = vmatpush1.msra.mxu0 0.0
    %1084 = vmatprep.subr.mxu0 0.0
    %1085 = vmatpush1.msra.mxu0 0.0
    %1086 = vmatprep.subr.mxu0 0.0
    %1087 = vmatpush1.msra.mxu0 0.0
    %1088 = vmatprep.subr.mxu0 0.0
    %1089 = vmatpush1.msra.mxu0 0.0
    %1090 = vmatprep.subr.mxu0 0.0
    %1091 = vmatpush1.msra.mxu0 0.0
    %1092 = vmatprep.subr.mxu0 0.0
    %1093 = vmatpush1.msra.mxu0 0.0
    %1094 = vmatprep.subr.mxu0 0.0
    %1095 = vmatpush1.msra.mxu0 0.0
    %1096 = vmatprep.subr.mxu0 0.0
    %1097 = vmatpush1.msra.mxu0 0.0
    %1098 = vmatprep.subr.mxu0 0.0
    %1099 = vmatpush1.msra.mxu0 0.0
    %1100 = vmatprep.mubr.f32.mxu0 0.0
    %1101 = vmatmul.mubr.f32.gmra.mrb[0].mxu0 %v1034
    %v1102 = vpop.f32.mrb[0].mxu0
    %v1103 = vadd.f32 %v50, %v1102
    %v1104 = vpop.f32.mrb[0].mxu0
    %1105 = vdwg.mxu0
    %1106 = vmatprep.subr.mxu0 0.0
    %1107 = vmatpush1.msra.mxu0 %v28
    %1108 = vmatprep.subr.mxu0 0.0
    %1109 = vmatpush1.msra.mxu0 %v29
    %1110 = vmatprep.subr.mxu0 0.0
    %1111 = vmatpush1.msra.mxu0 %v30
    %1112 = vmatprep.subr.mxu0 0.0
    %1113 = vmatpush1.msra.mxu0 %v31
    %1114 = vmatprep.subr.mxu0 0.0
    %1115 = vmatpush1.msra.mxu0 0.0
    %1116 = vmatprep.subr.mxu0 0.0
    %1117 = vmatpush1.msra.mxu0 0.0
    %1118 = vmatprep.subr.mxu0 0.0
    %1119 = vmatpush1.msra.mxu0 0.0
    %1120 = vmatprep.subr.mxu0 0.0
    %1121 = vmatpush1.msra.mxu0 0.0
    %1122 = vmatprep.subr.mxu0 0.0
    %1123 = vmatpush1.msra.mxu0 0.0
    %1124 = vmatprep.subr.mxu0 0.0
    %1125 = vmatpush1.msra.mxu0 0.0
    %1126 = vmatprep.subr.mxu0 0.0
    %1127 = vmatpush1.msra.mxu0 0.0
    %1128 = vmatprep.subr.mxu0 0.0
    %1129 = vmatpush1.msra.mxu0 0.0
    %1130 = vmatprep.subr.mxu0 0.0
    %1131 = vmatpush1.msra.mxu0 0.0
    %1132 = vmatprep.subr.mxu0 0.0
    %1133 = vmatpush1.msra.mxu0 0.0
    %1134 = vmatprep.subr.mxu0 0.0
    %1135 = vmatpush1.msra.mxu0 0.0
    %1136 = vmatprep.subr.mxu0 0.0
    %1137 = vmatpush1.msra.mxu0 0.0
    %1138 = vmatprep.subr.mxu0 0.0
    %1139 = vmatpush1.msra.mxu0 0.0
    %1140 = vmatprep.subr.mxu0 0.0
    %1141 = vmatpush1.msra.mxu0 0.0
    %1142 = vmatprep.subr.mxu0 0.0
    %1143 = vmatpush1.msra.mxu0 0.0
    %1144 = vmatprep.subr.mxu0 0.0
    %1145 = vmatpush1.msra.mxu0 0.0
    %1146 = vmatprep.subr.mxu0 0.0
    %1147 = vmatpush1.msra.mxu0 0.0
    %1148 = vmatprep.subr.mxu0 0.0
    %1149 = vmatpush1.msra.mxu0 0.0
    %1150 = vmatprep.subr.mxu0 0.0
    %1151 = vmatpush1.msra.mxu0 0.0
    %1152 = vmatprep.subr.mxu0 0.0
    %1153 = vmatpush1.msra.mxu0 0.0
    %1154 = vmatprep.subr.mxu0 0.0
    %1155 = vmatpush1.msra.mxu0 0.0
    %1156 = vmatprep.subr.mxu0 0.0
    %1157 = vmatpush1.msra.mxu0 0.0
    %1158 = vmatprep.subr.mxu0 0.0
    %1159 = vmatpush1.msra.mxu0 0.0
    %1160 = vmatprep.subr.mxu0 0.0
    %1161 = vmatpush1.msra.mxu0 0.0
    %1162 = vmatprep.subr.mxu0 0.0
    %1163 = vmatpush1.msra.mxu0 0.0
    %1164 = vmatprep.subr.mxu0 0.0
    %1165 = vmatpush1.msra.mxu0 0.0
    %1166 = vmatprep.subr.mxu0 0.0
    %1167 = vmatpush1.msra.mxu0 0.0
    %1168 = vmatprep.subr.mxu0 0.0
    %1169 = vmatpush1.msra.mxu0 0.0
    %1170 = vmatprep.mubr.f32.mxu0 0.0
    %1171 = vmatmul.mubr.f32.gmra.mrb[0].mxu0 %v1034
    %v1172 = vpop.f32.mrb[0].mxu0
    %v1173 = vadd.f32 %v130, %v1172
    %v1174 = vpop.f32.mrb[0].mxu0
    %1175 = vdwg.mxu0
    %1176 = vmatprep.subr.mxu0 0.0
    %1177 = vmatpush1.msra.mxu0 %v33
    %1178 = vmatprep.subr.mxu0 0.0
    %1179 = vmatpush1.msra.mxu0 %v34
    %1180 = vmatprep.subr.mxu0 0.0
    %1181 = vmatpush1.msra.mxu0 %v35
    %1182 = vmatprep.subr.mxu0 0.0
    %1183 = vmatpush1.msra.mxu0 %v36
    %1184 = vmatprep.subr.mxu0 0.0
    %1185 = vmatpush1.msra.mxu0 0.0
    %1186 = vmatprep.subr.mxu0 0.0
    %1187 = vmatpush1.msra.mxu0 0.0
    %1188 = vmatprep.subr.mxu0 0.0
    %1189 = vmatpush1.msra.mxu0 0.0
    %1190 = vmatprep.subr.mxu0 0.0
    %1191 = vmatpush1.msra.mxu0 0.0
    %1192 = vmatprep.subr.mxu0 0.0
    %1193 = vmatpush1.msra.mxu0 0.0
    %1194 = vmatprep.subr.mxu0 0.0
    %1195 = vmatpush1.msra.mxu0 0.0
    %1196 = vmatprep.subr.mxu0 0.0
    %1197 = vmatpush1.msra.mxu0 0.0
    %1198 = vmatprep.subr.mxu0 0.0
    %1199 = vmatpush1.msra.mxu0 0.0
    %1200 = vmatprep.subr.mxu0 0.0
    %1201 = vmatpush1.msra.mxu0 0.0
    %1202 = vmatprep.subr.mxu0 0.0
    %1203 = vmatpush1.msra.mxu0 0.0
    %1204 = vmatprep.subr.mxu0 0.0
    %1205 = vmatpush1.msra.mxu0 0.0
    %1206 = vmatprep.subr.mxu0 0.0
    %1207 = vmatpush1.msra.mxu0 0.0
    %1208 = vmatprep.subr.mxu0 0.0
    %1209 = vmatpush1.msra.mxu0 0.0
    %1210 = vmatprep.subr.mxu0 0.0
    %1211 = vmatpush1.msra.mxu0 0.0
    %1212 = vmatprep.subr.mxu0 0.0
    %1213 = vmatpush1.msra.mxu0 0.0
    %1214 = vmatprep.subr.mxu0 0.0
    %1215 = vmatpush1.msra.mxu0 0.0
    %1216 = vmatprep.subr.mxu0 0.0
    %1217 = vmatpush1.msra.mxu0 0.0
    %1218 = vmatprep.subr.mxu0 0.0
    %1219 = vmatpush1.msra.mxu0 0.0
    %1220 = vmatprep.subr.mxu0 0.0
    %1221 = vmatpush1.msra.mxu0 0.0
    %1222 = vmatprep.subr.mxu0 0.0
    %1223 = vmatpush1.msra.mxu0 0.0
    %1224 = vmatprep.subr.mxu0 0.0
    %1225 = vmatpush1.msra.mxu0 0.0
    %1226 = vmatprep.subr.mxu0 0.0
    %1227 = vmatpush1.msra.mxu0 0.0
    %1228 = vmatprep.subr.mxu0 0.0
    %1229 = vmatpush1.msra.mxu0 0.0
    %1230 = vmatprep.subr.mxu0 0.0
    %1231 = vmatpush1.msra.mxu0 0.0
    %1232 = vmatprep.subr.mxu0 0.0
    %1233 = vmatpush1.msra.mxu0 0.0
    %1234 = vmatprep.subr.mxu0 0.0
    %1235 = vmatpush1.msra.mxu0 0.0
    %1236 = vmatprep.subr.mxu0 0.0
    %1237 = vmatpush1.msra.mxu0 0.0
    %1238 = vmatprep.subr.mxu0 0.0
    %1239 = vmatpush1.msra.mxu0 0.0
    %1240 = vmatprep.mubr.f32.mxu0 0.0
    %1241 = vmatmul.mubr.f32.gmra.mrb[0].mxu0 %v1034
    %v1242 = vpop.f32.mrb[0].mxu0
    %v1243 = vadd.f32 %v206, %v1242
    %v1244 = vpop.f32.mrb[0].mxu0
    %1245 = vdwg.mxu0
    %v1246 = vadd.f32 %v1030, %v1103
    %v1247 = vxor.u32 %v1246, 2147483648
    %v1248 = vmul.f32 %v1247, 1.442695
    %v1249 = vpow.pop %v1248
    %v1250 = vadd.f32 %v1249, 1.0
    %v1251 = vrcp.pop %v1250
    %v1252 = vmul.f32 1.0, %v1251
    %v1253 = vadd.f32 %v1031, %v1173
    %v1254 = vxor.u32 %v1253, 2147483648
    %v1255 = vmul.f32 %v1254, 1.442695
    %v1256 = vpow.pop %v1255
    %v1257 = vadd.f32 %v1256, 1.0
    %v1258 = vrcp.pop %v1257
    %v1259 = vmul.f32 1.0, %v1258
    %v1260 = vmul.f32 %v1252, %v1243
    %v1261 = vadd.f32 %v1032, %v1260
    %v1262 = vtanh.pop %v1261
    %v1263 = vsub.f32 1.0, %v1259
    %v1264 = vmul.f32 %v1263, %v1262
    %v1265 = vmul.f32 %v1259, %v1028
    %v1266 = vadd.f32 %v1264, %v1265
    %1267 = vst.msk [vmem:[#allocation2] sm:$0xf] %vm299, %v1266
    %s1268 = scalar_lea.vmem %s3, 16
    %1269 = vst.msk [vmem:[%s1268] sm:$0xf] %vm299, %v1266
    %v1270 = vld [vmem:[#allocation2] sm:$0xf]
    %s1271 = scalar_lea.vmem %s0, 60
    %v1272 = vld [vmem:[%s1271] sm:$0xf]
    %v1273 = vld [vmem:[%s1271 + $0x4] sm:$0xf]
    %v1274 = vld [vmem:[%s1271 + $0x8] sm:$0xf]
    %v1276 = vsel %vm52, %v1270, 0
    %1278 = vmatprep.subr.mxu0 0.0
    %1279 = vmatpush1.msra.mxu0 %v23
    %1280 = vmatprep.subr.mxu0 0.0
    %1281 = vmatpush1.msra.mxu0 %v24
    %1282 = vmatprep.subr.mxu0 0.0
    %1283 = vmatpush1.msra.mxu0 %v25
    %1284 = vmatprep.subr.mxu0 0.0
    %1285 = vmatpush1.msra.mxu0 %v26
    %1286 = vmatprep.subr.mxu0 0.0
    %1287 = vmatpush1.msra.mxu0 0.0
    %1288 = vmatprep.subr.mxu0 0.0
    %1289 = vmatpush1.msra.mxu0 0.0
    %1290 = vmatprep.subr.mxu0 0.0
    %1291 = vmatpush1.msra.mxu0 0.0
    %1292 = vmatprep.subr.mxu0 0.0
    %1293 = vmatpush1.msra.mxu0 0.0
    %1294 = vmatprep.subr.mxu0 0.0
    %1295 = vmatpush1.msra.mxu0 0.0
    %1296 = vmatprep.subr.mxu0 0.0
    %1297 = vmatpush1.msra.mxu0 0.0
    %1298 = vmatprep.subr.mxu0 0.0
    %1299 = vmatpush1.msra.mxu0 0.0
    %1300 = vmatprep.subr.mxu0 0.0
    %1301 = vmatpush1.msra.mxu0 0.0
    %1302 = vmatprep.subr.mxu0 0.0
    %1303 = vmatpush1.msra.mxu0 0.0
    %1304 = vmatprep.subr.mxu0 0.0
    %1305 = vmatpush1.msra.mxu0 0.0
    %1306 = vmatprep.subr.mxu0 0.0
    %1307 = vmatpush1.msra.mxu0 0.0
    %1308 = vmatprep.subr.mxu0 0.0
    %1309 = vmatpush1.msra.mxu0 0.0
    %1310 = vmatprep.subr.mxu0 0.0
    %1311 = vmatpush1.msra.mxu0 0.0
    %1312 = vmatprep.subr.mxu0 0.0
    %1313 = vmatpush1.msra.mxu0 0.0
    %1314 = vmatprep.subr.mxu0 0.0
    %1315 = vmatpush1.msra.mxu0 0.0
    %1316 = vmatprep.subr.mxu0 0.0
    %1317 = vmatpush1.msra.mxu0 0.0
    %1318 = vmatprep.subr.mxu0 0.0
    %1319 = vmatpush1.msra.mxu0 0.0
    %1320 = vmatprep.subr.mxu0 0.0
    %1321 = vmatpush1.msra.mxu0 0.0
    %1322 = vmatprep.subr.mxu0 0.0
    %1323 = vmatpush1.msra.mxu0 0.0
    %1324 = vmatprep.subr.mxu0 0.0
    %1325 = vmatpush1.msra.mxu0 0.0
    %1326 = vmatprep.subr.mxu0 0.0
    %1327 = vmatpush1.msra.mxu0 0.0
    %1328 = vmatprep.subr.mxu0 0.0
    %1329 = vmatpush1.msra.mxu0 0.0
    %1330 = vmatprep.subr.mxu0 0.0
    %1331 = vmatpush1.msra.mxu0 0.0
    %1332 = vmatprep.subr.mxu0 0.0
    %1333 = vmatpush1.msra.mxu0 0.0
    %1334 = vmatprep.subr.mxu0 0.0
    %1335 = vmatpush1.msra.mxu0 0.0
    %1336 = vmatprep.subr.mxu0 0.0
    %1337 = vmatpush1.msra.mxu0 0.0
    %1338 = vmatprep.subr.mxu0 0.0
    %1339 = vmatpush1.msra.mxu0 0.0
    %1340 = vmatprep.subr.mxu0 0.0
    %1341 = vmatpush1.msra.mxu0 0.0
    %1342 = vmatprep.mubr.f32.mxu0 0.0
    %1343 = vmatmul.mubr.f32.gmra.mrb[0].mxu0 %v1276
    %v1344 = vpop.f32.mrb[0].mxu0
    %v1345 = vadd.f32 %v50, %v1344
    %v1346 = vpop.f32.mrb[0].mxu0
    %1347 = vdwg.mxu0
    %1348 = vmatprep.subr.mxu0 0.0
    %1349 = vmatpush1.msra.mxu0 %v28
    %1350 = vmatprep.subr.mxu0 0.0
    %1351 = vmatpush1.msra.mxu0 %v29
    %1352 = vmatprep.subr.mxu0 0.0
    %1353 = vmatpush1.msra.mxu0 %v30
    %1354 = vmatprep.subr.mxu0 0.0
    %1355 = vmatpush1.msra.mxu0 %v31
    %1356 = vmatprep.subr.mxu0 0.0
    %1357 = vmatpush1.msra.mxu0 0.0
    %1358 = vmatprep.subr.mxu0 0.0
    %1359 = vmatpush1.msra.mxu0 0.0
    %1360 = vmatprep.subr.mxu0 0.0
    %1361 = vmatpush1.msra.mxu0 0.0
    %1362 = vmatprep.subr.mxu0 0.0
    %1363 = vmatpush1.msra.mxu0 0.0
    %1364 = vmatprep.subr.mxu0 0.0
    %1365 = vmatpush1.msra.mxu0 0.0
    %1366 = vmatprep.subr.mxu0 0.0
    %1367 = vmatpush1.msra.mxu0 0.0
    %1368 = vmatprep.subr.mxu0 0.0
    %1369 = vmatpush1.msra.mxu0 0.0
    %1370 = vmatprep.subr.mxu0 0.0
    %1371 = vmatpush1.msra.mxu0 0.0
    %1372 = vmatprep.subr.mxu0 0.0
    %1373 = vmatpush1.msra.mxu0 0.0
    %1374 = vmatprep.subr.mxu0 0.0
    %1375 = vmatpush1.msra.mxu0 0.0
    %1376 = vmatprep.subr.mxu0 0.0
    %1377 = vmatpush1.msra.mxu0 0.0
    %1378 = vmatprep.subr.mxu0 0.0
    %1379 = vmatpush1.msra.mxu0 0.0
    %1380 = vmatprep.subr.mxu0 0.0
    %1381 = vmatpush1.msra.mxu0 0.0
    %1382 = vmatprep.subr.mxu0 0.0
    %1383 = vmatpush1.msra.mxu0 0.0
    %1384 = vmatprep.subr.mxu0 0.0
    %1385 = vmatpush1.msra.mxu0 0.0
    %1386 = vmatprep.subr.mxu0 0.0
    %1387 = vmatpush1.msra.mxu0 0.0
    %1388 = vmatprep.subr.mxu0 0.0
    %1389 = vmatpush1.msra.mxu0 0.0
    %1390 = vmatprep.subr.mxu0 0.0
    %1391 = vmatpush1.msra.mxu0 0.0
    %1392 = vmatprep.subr.mxu0 0.0
    %1393 = vmatpush1.msra.mxu0 0.0
    %1394 = vmatprep.subr.mxu0 0.0
    %1395 = vmatpush1.msra.mxu0 0.0
    %1396 = vmatprep.subr.mxu0 0.0
    %1397 = vmatpush1.msra.mxu0 0.0
    %1398 = vmatprep.subr.mxu0 0.0
    %1399 = vmatpush1.msra.mxu0 0.0
    %1400 = vmatprep.subr.mxu0 0.0
    %1401 = vmatpush1.msra.mxu0 0.0
    %1402 = vmatprep.subr.mxu0 0.0
    %1403 = vmatpush1.msra.mxu0 0.0
    %1404 = vmatprep.subr.mxu0 0.0
    %1405 = vmatpush1.msra.mxu0 0.0
    %1406 = vmatprep.subr.mxu0 0.0
    %1407 = vmatpush1.msra.mxu0 0.0
    %1408 = vmatprep.subr.mxu0 0.0
    %1409 = vmatpush1.msra.mxu0 0.0
    %1410 = vmatprep.subr.mxu0 0.0
    %1411 = vmatpush1.msra.mxu0 0.0
    %1412 = vmatprep.mubr.f32.mxu0 0.0
    %1413 = vmatmul.mubr.f32.gmra.mrb[0].mxu0 %v1276
    %v1414 = vpop.f32.mrb[0].mxu0
    %v1415 = vadd.f32 %v130, %v1414
    %v1416 = vpop.f32.mrb[0].mxu0
    %1417 = vdwg.mxu0
    %1418 = vmatprep.subr.mxu0 0.0
    %1419 = vmatpush1.msra.mxu0 %v33
    %1420 = vmatprep.subr.mxu0 0.0
    %1421 = vmatpush1.msra.mxu0 %v34
    %1422 = vmatprep.subr.mxu0 0.0
    %1423 = vmatpush1.msra.mxu0 %v35
    %1424 = vmatprep.subr.mxu0 0.0
    %1425 = vmatpush1.msra.mxu0 %v36
    %1426 = vmatprep.subr.mxu0 0.0
    %1427 = vmatpush1.msra.mxu0 0.0
    %1428 = vmatprep.subr.mxu0 0.0
    %1429 = vmatpush1.msra.mxu0 0.0
    %1430 = vmatprep.subr.mxu0 0.0
    %1431 = vmatpush1.msra.mxu0 0.0
    %1432 = vmatprep.subr.mxu0 0.0
    %1433 = vmatpush1.msra.mxu0 0.0
    %1434 = vmatprep.subr.mxu0 0.0
    %1435 = vmatpush1.msra.mxu0 0.0
    %1436 = vmatprep.subr.mxu0 0.0
    %1437 = vmatpush1.msra.mxu0 0.0
    %1438 = vmatprep.subr.mxu0 0.0
    %1439 = vmatpush1.msra.mxu0 0.0
    %1440 = vmatprep.subr.mxu0 0.0
    %1441 = vmatpush1.msra.mxu0 0.0
    %1442 = vmatprep.subr.mxu0 0.0
    %1443 = vmatpush1.msra.mxu0 0.0
    %1444 = vmatprep.subr.mxu0 0.0
    %1445 = vmatpush1.msra.mxu0 0.0
    %1446 = vmatprep.subr.mxu0 0.0
    %1447 = vmatpush1.msra.mxu0 0.0
    %1448 = vmatprep.subr.mxu0 0.0
    %1449 = vmatpush1.msra.mxu0 0.0
    %1450 = vmatprep.subr.mxu0 0.0
    %1451 = vmatpush1.msra.mxu0 0.0
    %1452 = vmatprep.subr.mxu0 0.0
    %1453 = vmatpush1.msra.mxu0 0.0
    %1454 = vmatprep.subr.mxu0 0.0
    %1455 = vmatpush1.msra.mxu0 0.0
    %1456 = vmatprep.subr.mxu0 0.0
    %1457 = vmatpush1.msra.mxu0 0.0
    %1458 = vmatprep.subr.mxu0 0.0
    %1459 = vmatpush1.msra.mxu0 0.0
    %1460 = vmatprep.subr.mxu0 0.0
    %1461 = vmatpush1.msra.mxu0 0.0
    %1462 = vmatprep.subr.mxu0 0.0
    %1463 = vmatpush1.msra.mxu0 0.0
    %1464 = vmatprep.subr.mxu0 0.0
    %1465 = vmatpush1.msra.mxu0 0.0
    %1466 = vmatprep.subr.mxu0 0.0
    %1467 = vmatpush1.msra.mxu0 0.0
    %1468 = vmatprep.subr.mxu0 0.0
    %1469 = vmatpush1.msra.mxu0 0.0
    %1470 = vmatprep.subr.mxu0 0.0
    %1471 = vmatpush1.msra.mxu0 0.0
    %1472 = vmatprep.subr.mxu0 0.0
    %1473 = vmatpush1.msra.mxu0 0.0
    %1474 = vmatprep.subr.mxu0 0.0
    %1475 = vmatpush1.msra.mxu0 0.0
    %1476 = vmatprep.subr.mxu0 0.0
    %1477 = vmatpush1.msra.mxu0 0.0
    %1478 = vmatprep.subr.mxu0 0.0
    %1479 = vmatpush1.msra.mxu0 0.0
    %1480 = vmatprep.subr.mxu0 0.0
    %1481 = vmatpush1.msra.mxu0 0.0
    %1482 = vmatprep.mubr.f32.mxu0 0.0
    %1483 = vmatmul.mubr.f32.gmra.mrb[0].mxu0 %v1276
    %v1484 = vpop.f32.mrb[0].mxu0
    %v1485 = vadd.f32 %v206, %v1484
    %v1486 = vpop.f32.mrb[0].mxu0
    %1487 = vdwg.mxu0
    %v1488 = vadd.f32 %v1272, %v1345
    %v1489 = vxor.u32 %v1488, 2147483648
    %v1490 = vmul.f32 %v1489, 1.442695
    %v1491 = vpow.pop %v1490
    %v1492 = vadd.f32 %v1491, 1.0
    %v1493 = vrcp.pop %v1492
    %v1494 = vmul.f32 1.0, %v1493
    %v1495 = vadd.f32 %v1273, %v1415
    %v1496 = vxor.u32 %v1495, 2147483648
    %v1497 = vmul.f32 %v1496, 1.442695
    %v1498 = vpow.pop %v1497
    %v1499 = vadd.f32 %v1498, 1.0
    %v1500 = vrcp.pop %v1499
    %v1501 = vmul.f32 1.0, %v1500
    %v1502 = vmul.f32 %v1494, %v1485
    %v1503 = vadd.f32 %v1274, %v1502
    %v1504 = vtanh.pop %v1503
    %v1505 = vsub.f32 1.0, %v1501
    %v1506 = vmul.f32 %v1505, %v1504
    %v1507 = vmul.f32 %v1501, %v1270
    %v1508 = vadd.f32 %v1506, %v1507
    %1509 = vst.msk [vmem:[#allocation2] sm:$0xf] %vm299, %v1508
    %s1510 = scalar_lea.vmem %s3, 20
    %1511 = vst.msk [vmem:[%s1510] sm:$0xf] %vm299, %v1508
    %v1512 = vld [vmem:[#allocation2] sm:$0xf]
    %s1513 = scalar_lea.vmem %s0, 72
    %v1514 = vld [vmem:[%s1513] sm:$0xf]
    %v1515 = vld [vmem:[%s1513 + $0x4] sm:$0xf]
    %v1516 = vld [vmem:[%s1513 + $0x8] sm:$0xf]
    %v1518 = vsel %vm52, %v1512, 0
    %1520 = vmatprep.subr.mxu0 0.0
    %1521 = vmatpush1.msra.mxu0 %v23
    %1522 = vmatprep.subr.mxu0 0.0
    %1523 = vmatpush1.msra.mxu0 %v24
    %1524 = vmatprep.subr.mxu0 0.0
    %1525 = vmatpush1.msra.mxu0 %v25
    %1526 = vmatprep.subr.mxu0 0.0
    %1527 = vmatpush1.msra.mxu0 %v26
    %1528 = vmatprep.subr.mxu0 0.0
    %1529 = vmatpush1.msra.mxu0 0.0
    %1530 = vmatprep.subr.mxu0 0.0
    %1531 = vmatpush1.msra.mxu0 0.0
    %1532 = vmatprep.subr.mxu0 0.0
    %1533 = vmatpush1.msra.mxu0 0.0
    %1534 = vmatprep.subr.mxu0 0.0
    %1535 = vmatpush1.msra.mxu0 0.0
    %1536 = vmatprep.subr.mxu0 0.0
    %1537 = vmatpush1.msra.mxu0 0.0
    %1538 = vmatprep.subr.mxu0 0.0
    %1539 = vmatpush1.msra.mxu0 0.0
    %1540 = vmatprep.subr.mxu0 0.0
    %1541 = vmatpush1.msra.mxu0 0.0
    %1542 = vmatprep.subr.mxu0 0.0
    %1543 = vmatpush1.msra.mxu0 0.0
    %1544 = vmatprep.subr.mxu0 0.0
    %1545 = vmatpush1.msra.mxu0 0.0
    %1546 = vmatprep.subr.mxu0 0.0
    %1547 = vmatpush1.msra.mxu0 0.0
    %1548 = vmatprep.subr.mxu0 0.0
    %1549 = vmatpush1.msra.mxu0 0.0
    %1550 = vmatprep.subr.mxu0 0.0
    %1551 = vmatpush1.msra.mxu0 0.0
    %1552 = vmatprep.subr.mxu0 0.0
    %1553 = vmatpush1.msra.mxu0 0.0
    %1554 = vmatprep.subr.mxu0 0.0
    %1555 = vmatpush1.msra.mxu0 0.0
    %1556 = vmatprep.subr.mxu0 0.0
    %1557 = vmatpush1.msra.mxu0 0.0
    %1558 = vmatprep.subr.mxu0 0.0
    %1559 = vmatpush1.msra.mxu0 0.0
    %1560 = vmatprep.subr.mxu0 0.0
    %1561 = vmatpush1.msra.mxu0 0.0
    %1562 = vmatprep.subr.mxu0 0.0
    %1563 = vmatpush1.msra.mxu0 0.0
    %1564 = vmatprep.subr.mxu0 0.0
    %1565 = vmatpush1.msra.mxu0 0.0
    %1566 = vmatprep.subr.mxu0 0.0
    %1567 = vmatpush1.msra.mxu0 0.0
    %1568 = vmatprep.subr.mxu0 0.0
    %1569 = vmatpush1.msra.mxu0 0.0
    %1570 = vmatprep.subr.mxu0 0.0
    %1571 = vmatpush1.msra.mxu0 0.0
    %1572 = vmatprep.subr.mxu0 0.0
    %1573 = vmatpush1.msra.mxu0 0.0
    %1574 = vmatprep.subr.mxu0 0.0
    %1575 = vmatpush1.msra.mxu0 0.0
    %1576 = vmatprep.subr.mxu0 0.0
    %1577 = vmatpush1.msra.mxu0 0.0
    %1578 = vmatprep.subr.mxu0 0.0
    %1579 = vmatpush1.msra.mxu0 0.0
    %1580 = vmatprep.subr.mxu0 0.0
    %1581 = vmatpush1.msra.mxu0 0.0
    %1582 = vmatprep.subr.mxu0 0.0
    %1583 = vmatpush1.msra.mxu0 0.0
    %1584 = vmatprep.mubr.f32.mxu0 0.0
    %1585 = vmatmul.mubr.f32.gmra.mrb[0].mxu0 %v1518
    %v1586 = vpop.f32.mrb[0].mxu0
    %v1587 = vadd.f32 %v50, %v1586
    %v1588 = vpop.f32.mrb[0].mxu0
    %1589 = vdwg.mxu0
    %1590 = vmatprep.subr.mxu0 0.0
    %1591 = vmatpush1.msra.mxu0 %v28
    %1592 = vmatprep.subr.mxu0 0.0
    %1593 = vmatpush1.msra.mxu0 %v29
    %1594 = vmatprep.subr.mxu0 0.0
    %1595 = vmatpush1.msra.mxu0 %v30
    %1596 = vmatprep.subr.mxu0 0.0
    %1597 = vmatpush1.msra.mxu0 %v31
    %1598 = vmatprep.subr.mxu0 0.0
    %1599 = vmatpush1.msra.mxu0 0.0
    %1600 = vmatprep.subr.mxu0 0.0
    %1601 = vmatpush1.msra.mxu0 0.0
    %1602 = vmatprep.subr.mxu0 0.0
    %1603 = vmatpush1.msra.mxu0 0.0
    %1604 = vmatprep.subr.mxu0 0.0
    %1605 = vmatpush1.msra.mxu0 0.0
    %1606 = vmatprep.subr.mxu0 0.0
    %1607 = vmatpush1.msra.mxu0 0.0
    %1608 = vmatprep.subr.mxu0 0.0
    %1609 = vmatpush1.msra.mxu0 0.0
    %1610 = vmatprep.subr.mxu0 0.0
    %1611 = vmatpush1.msra.mxu0 0.0
    %1612 = vmatprep.subr.mxu0 0.0
    %1613 = vmatpush1.msra.mxu0 0.0
    %1614 = vmatprep.subr.mxu0 0.0
    %1615 = vmatpush1.msra.mxu0 0.0
    %1616 = vmatprep.subr.mxu0 0.0
    %1617 = vmatpush1.msra.mxu0 0.0
    %1618 = vmatprep.subr.mxu0 0.0
    %1619 = vmatpush1.msra.mxu0 0.0
    %1620 = vmatprep.subr.mxu0 0.0
    %1621 = vmatpush1.msra.mxu0 0.0
    %1622 = vmatprep.subr.mxu0 0.0
    %1623 = vmatpush1.msra.mxu0 0.0
    %1624 = vmatprep.subr.mxu0 0.0
    %1625 = vmatpush1.msra.mxu0 0.0
    %1626 = vmatprep.subr.mxu0 0.0
    %1627 = vmatpush1.msra.mxu0 0.0
    %1628 = vmatprep.subr.mxu0 0.0
    %1629 = vmatpush1.msra.mxu0 0.0
    %1630 = vmatprep.subr.mxu0 0.0
    %1631 = vmatpush1.msra.mxu0 0.0
    %1632 = vmatprep.subr.mxu0 0.0
    %1633 = vmatpush1.msra.mxu0 0.0
    %1634 = vmatprep.subr.mxu0 0.0
    %1635 = vmatpush1.msra.mxu0 0.0
    %1636 = vmatprep.subr.mxu0 0.0
    %1637 = vmatpush1.msra.mxu0 0.0
    %1638 = vmatprep.subr.mxu0 0.0
    %1639 = vmatpush1.msra.mxu0 0.0
    %1640 = vmatprep.subr.mxu0 0.0
    %1641 = vmatpush1.msra.mxu0 0.0
    %1642 = vmatprep.subr.mxu0 0.0
    %1643 = vmatpush1.msra.mxu0 0.0
    %1644 = vmatprep.subr.mxu0 0.0
    %1645 = vmatpush1.msra.mxu0 0.0
    %1646 = vmatprep.subr.mxu0 0.0
    %1647 = vmatpush1.msra.mxu0 0.0
    %1648 = vmatprep.subr.mxu0 0.0
    %1649 = vmatpush1.msra.mxu0 0.0
    %1650 = vmatprep.subr.mxu0 0.0
    %1651 = vmatpush1.msra.mxu0 0.0
    %1652 = vmatprep.subr.mxu0 0.0
    %1653 = vmatpush1.msra.mxu0 0.0
    %1654 = vmatprep.mubr.f32.mxu0 0.0
    %1655 = vmatmul.mubr.f32.gmra.mrb[0].mxu0 %v1518
    %v1656 = vpop.f32.mrb[0].mxu0
    %v1657 = vadd.f32 %v130, %v1656
    %v1658 = vpop.f32.mrb[0].mxu0
    %1659 = vdwg.mxu0
    %1660 = vmatprep.subr.mxu0 0.0
    %1661 = vmatpush1.msra.mxu0 %v33
    %1662 = vmatprep.subr.mxu0 0.0
    %1663 = vmatpush1.msra.mxu0 %v34
    %1664 = vmatprep.subr.mxu0 0.0
    %1665 = vmatpush1.msra.mxu0 %v35
    %1666 = vmatprep.subr.mxu0 0.0
    %1667 = vmatpush1.msra.mxu0 %v36
    %1668 = vmatprep.subr.mxu0 0.0
    %1669 = vmatpush1.msra.mxu0 0.0
    %1670 = vmatprep.subr.mxu0 0.0
    %1671 = vmatpush1.msra.mxu0 0.0
    %1672 = vmatprep.subr.mxu0 0.0
    %1673 = vmatpush1.msra.mxu0 0.0
    %1674 = vmatprep.subr.mxu0 0.0
    %1675 = vmatpush1.msra.mxu0 0.0
    %1676 = vmatprep.subr.mxu0 0.0
    %1677 = vmatpush1.msra.mxu0 0.0
    %1678 = vmatprep.subr.mxu0 0.0
    %1679 = vmatpush1.msra.mxu0 0.0
    %1680 = vmatprep.subr.mxu0 0.0
    %1681 = vmatpush1.msra.mxu0 0.0
    %1682 = vmatprep.subr.mxu0 0.0
    %1683 = vmatpush1.msra.mxu0 0.0
    %1684 = vmatprep.subr.mxu0 0.0
    %1685 = vmatpush1.msra.mxu0 0.0
    %1686 = vmatprep.subr.mxu0 0.0
    %1687 = vmatpush1.msra.mxu0 0.0
    %1688 = vmatprep.subr.mxu0 0.0
    %1689 = vmatpush1.msra.mxu0 0.0
    %1690 = vmatprep.subr.mxu0 0.0
    %1691 = vmatpush1.msra.mxu0 0.0
    %1692 = vmatprep.subr.mxu0 0.0
    %1693 = vmatpush1.msra.mxu0 0.0
    %1694 = vmatprep.subr.mxu0 0.0
    %1695 = vmatpush1.msra.mxu0 0.0
    %1696 = vmatprep.subr.mxu0 0.0
    %1697 = vmatpush1.msra.mxu0 0.0
    %1698 = vmatprep.subr.mxu0 0.0
    %1699 = vmatpush1.msra.mxu0 0.0
    %1700 = vmatprep.subr.mxu0 0.0
    %1701 = vmatpush1.msra.mxu0 0.0
    %1702 = vmatprep.subr.mxu0 0.0
    %1703 = vmatpush1.msra.mxu0 0.0
    %1704 = vmatprep.subr.mxu0 0.0
    %1705 = vmatpush1.msra.mxu0 0.0
    %1706 = vmatprep.subr.mxu0 0.0
    %1707 = vmatpush1.msra.mxu0 0.0
    %1708 = vmatprep.subr.mxu0 0.0
    %1709 = vmatpush1.msra.mxu0 0.0
    %1710 = vmatprep.subr.mxu0 0.0
    %1711 = vmatpush1.msra.mxu0 0.0
    %1712 = vmatprep.subr.mxu0 0.0
    %1713 = vmatpush1.msra.mxu0 0.0
    %1714 = vmatprep.subr.mxu0 0.0
    %1715 = vmatpush1.msra.mxu0 0.0
    %1716 = vmatprep.subr.mxu0 0.0
    %1717 = vmatpush1.msra.mxu0 0.0
    %1718 = vmatprep.subr.mxu0 0.0
    %1719 = vmatpush1.msra.mxu0 0.0
    %1720 = vmatprep.subr.mxu0 0.0
    %1721 = vmatpush1.msra.mxu0 0.0
    %1722 = vmatprep.subr.mxu0 0.0
    %1723 = vmatpush1.msra.mxu0 0.0
    %1724 = vmatprep.mubr.f32.mxu0 0.0
    %1725 = vmatmul.mubr.f32.gmra.mrb[0].mxu0 %v1518
    %v1726 = vpop.f32.mrb[0].mxu0
    %v1727 = vadd.f32 %v206, %v1726
    %v1728 = vpop.f32.mrb[0].mxu0
    %1729 = vdwg.mxu0
    %v1730 = vadd.f32 %v1514, %v1587
    %v1731 = vxor.u32 %v1730, 2147483648
    %v1732 = vmul.f32 %v1731, 1.442695
    %v1733 = vpow.pop %v1732
    %v1734 = vadd.f32 %v1733, 1.0
    %v1735 = vrcp.pop %v1734
    %v1736 = vmul.f32 1.0, %v1735
    %v1737 = vadd.f32 %v1515, %v1657
    %v1738 = vxor.u32 %v1737, 2147483648
    %v1739 = vmul.f32 %v1738, 1.442695
    %v1740 = vpow.pop %v1739
    %v1741 = vadd.f32 %v1740, 1.0
    %v1742 = vrcp.pop %v1741
    %v1743 = vmul.f32 1.0, %v1742
    %v1744 = vmul.f32 %v1736, %v1727
    %v1745 = vadd.f32 %v1516, %v1744
    %v1746 = vtanh.pop %v1745
    %v1747 = vsub.f32 1.0, %v1743
    %v1748 = vmul.f32 %v1747, %v1746
    %v1749 = vmul.f32 %v1743, %v1512
    %v1750 = vadd.f32 %v1748, %v1749
    %1751 = vst.msk [vmem:[#allocation2] sm:$0xf] %vm299, %v1750
    %s1752 = scalar_lea.vmem %s3, 24
    %1753 = vst.msk [vmem:[%s1752] sm:$0xf] %vm299, %v1750
    %v1754 = vld [vmem:[#allocation2] sm:$0xf]
    %s1755 = scalar_lea.vmem %s0, 84
    %v1756 = vld [vmem:[%s1755] sm:$0xf]
    %v1757 = vld [vmem:[%s1755 + $0x4] sm:$0xf]
    %v1758 = vld [vmem:[%s1755 + $0x8] sm:$0xf]
    %v1760 = vsel %vm52, %v1754, 0
    %1762 = vmatprep.subr.mxu0 0.0
    %1763 = vmatpush1.msra.mxu0 %v23
    %1764 = vmatprep.subr.mxu0 0.0
    %1765 = vmatpush1.msra.mxu0 %v24
    %1766 = vmatprep.subr.mxu0 0.0
    %1767 = vmatpush1.msra.mxu0 %v25
    %1768 = vmatprep.subr.mxu0 0.0
    %1769 = vmatpush1.msra.mxu0 %v26
    %1770 = vmatprep.subr.mxu0 0.0
    %1771 = vmatpush1.msra.mxu0 0.0
    %1772 = vmatprep.subr.mxu0 0.0
    %1773 = vmatpush1.msra.mxu0 0.0
    %1774 = vmatprep.subr.mxu0 0.0
    %1775 = vmatpush1.msra.mxu0 0.0
    %1776 = vmatprep.subr.mxu0 0.0
    %1777 = vmatpush1.msra.mxu0 0.0
    %1778 = vmatprep.subr.mxu0 0.0
    %1779 = vmatpush1.msra.mxu0 0.0
    %1780 = vmatprep.subr.mxu0 0.0
    %1781 = vmatpush1.msra.mxu0 0.0
    %1782 = vmatprep.subr.mxu0 0.0
    %1783 = vmatpush1.msra.mxu0 0.0
    %1784 = vmatprep.subr.mxu0 0.0
    %1785 = vmatpush1.msra.mxu0 0.0
    %1786 = vmatprep.subr.mxu0 0.0
    %1787 = vmatpush1.msra.mxu0 0.0
    %1788 = vmatprep.subr.mxu0 0.0
    %1789 = vmatpush1.msra.mxu0 0.0
    %1790 = vmatprep.subr.mxu0 0.0
    %1791 = vmatpush1.msra.mxu0 0.0
    %1792 = vmatprep.subr.mxu0 0.0
    %1793 = vmatpush1.msra.mxu0 0.0
    %1794 = vmatprep.subr.mxu0 0.0
    %1795 = vmatpush1.msra.mxu0 0.0
    %1796 = vmatprep.subr.mxu0 0.0
    %1797 = vmatpush1.msra.mxu0 0.0
    %1798 = vmatprep.subr.mxu0 0.0
    %1799 = vmatpush1.msra.mxu0 0.0
    %1800 = vmatprep.subr.mxu0 0.0
    %1801 = vmatpush1.msra.mxu0 0.0
    %1802 = vmatprep.subr.mxu0 0.0
    %1803 = vmatpush1.msra.mxu0 0.0
    %1804 = vmatprep.subr.mxu0 0.0
    %1805 = vmatpush1.msra.mxu0 0.0
    %1806 = vmatprep.subr.mxu0 0.0
    %1807 = vmatpush1.msra.mxu0 0.0
    %1808 = vmatprep.subr.mxu0 0.0
    %1809 = vmatpush1.msra.mxu0 0.0
    %1810 = vmatprep.subr.mxu0 0.0
    %1811 = vmatpush1.msra.mxu0 0.0
    %1812 = vmatprep.subr.mxu0 0.0
    %1813 = vmatpush1.msra.mxu0 0.0
    %1814 = vmatprep.subr.mxu0 0.0
    %1815 = vmatpush1.msra.mxu0 0.0
    %1816 = vmatprep.subr.mxu0 0.0
    %1817 = vmatpush1.msra.mxu0 0.0
    %1818 = vmatprep.subr.mxu0 0.0
    %1819 = vmatpush1.msra.mxu0 0.0
    %1820 = vmatprep.subr.mxu0 0.0
    %1821 = vmatpush1.msra.mxu0 0.0
    %1822 = vmatprep.subr.mxu0 0.0
    %1823 = vmatpush1.msra.mxu0 0.0
    %1824 = vmatprep.subr.mxu0 0.0
    %1825 = vmatpush1.msra.mxu0 0.0
    %1826 = vmatprep.mubr.f32.mxu0 0.0
    %1827 = vmatmul.mubr.f32.gmra.mrb[0].mxu0 %v1760
    %v1828 = vpop.f32.mrb[0].mxu0
    %v1829 = vadd.f32 %v50, %v1828
    %v1830 = vpop.f32.mrb[0].mxu0
    %1831 = vdwg.mxu0
    %1832 = vmatprep.subr.mxu0 0.0
    %1833 = vmatpush1.msra.mxu0 %v28
    %1834 = vmatprep.subr.mxu0 0.0
    %1835 = vmatpush1.msra.mxu0 %v29
    %1836 = vmatprep.subr.mxu0 0.0
    %1837 = vmatpush1.msra.mxu0 %v30
    %1838 = vmatprep.subr.mxu0 0.0
    %1839 = vmatpush1.msra.mxu0 %v31
    %1840 = vmatprep.subr.mxu0 0.0
    %1841 = vmatpush1.msra.mxu0 0.0
    %1842 = vmatprep.subr.mxu0 0.0
    %1843 = vmatpush1.msra.mxu0 0.0
    %1844 = vmatprep.subr.mxu0 0.0
    %1845 = vmatpush1.msra.mxu0 0.0
    %1846 = vmatprep.subr.mxu0 0.0
    %1847 = vmatpush1.msra.mxu0 0.0
    %1848 = vmatprep.subr.mxu0 0.0
    %1849 = vmatpush1.msra.mxu0 0.0
    %1850 = vmatprep.subr.mxu0 0.0
    %1851 = vmatpush1.msra.mxu0 0.0
    %1852 = vmatprep.subr.mxu0 0.0
    %1853 = vmatpush1.msra.mxu0 0.0
    %1854 = vmatprep.subr.mxu0 0.0
    %1855 = vmatpush1.msra.mxu0 0.0
    %1856 = vmatprep.subr.mxu0 0.0
    %1857 = vmatpush1.msra.mxu0 0.0
    %1858 = vmatprep.subr.mxu0 0.0
    %1859 = vmatpush1.msra.mxu0 0.0
    %1860 = vmatprep.subr.mxu0 0.0
    %1861 = vmatpush1.msra.mxu0 0.0
    %1862 = vmatprep.subr.mxu0 0.0
    %1863 = vmatpush1.msra.mxu0 0.0
    %1864 = vmatprep.subr.mxu0 0.0
    %1865 = vmatpush1.msra.mxu0 0.0
    %1866 = vmatprep.subr.mxu0 0.0
    %1867 = vmatpush1.msra.mxu0 0.0
    %1868 = vmatprep.subr.mxu0 0.0
    %1869 = vmatpush1.msra.mxu0 0.0
    %1870 = vmatprep.subr.mxu0 0.0
    %1871 = vmatpush1.msra.mxu0 0.0
    %1872 = vmatprep.subr.mxu0 0.0
    %1873 = vmatpush1.msra.mxu0 0.0
    %1874 = vmatprep.subr.mxu0 0.0
    %1875 = vmatpush1.msra.mxu0 0.0
    %1876 = vmatprep.subr.mxu0 0.0
    %1877 = vmatpush1.msra.mxu0 0.0
    %1878 = vmatprep.subr.mxu0 0.0
    %1879 = vmatpush1.msra.mxu0 0.0
    %1880 = vmatprep.subr.mxu0 0.0
    %1881 = vmatpush1.msra.mxu0 0.0
    %1882 = vmatprep.subr.mxu0 0.0
    %1883 = vmatpush1.msra.mxu0 0.0
    %1884 = vmatprep.subr.mxu0 0.0
    %1885 = vmatpush1.msra.mxu0 0.0
    %1886 = vmatprep.subr.mxu0 0.0
    %1887 = vmatpush1.msra.mxu0 0.0
    %1888 = vmatprep.subr.mxu0 0.0
    %1889 = vmatpush1.msra.mxu0 0.0
    %1890 = vmatprep.subr.mxu0 0.0
    %1891 = vmatpush1.msra.mxu0 0.0
    %1892 = vmatprep.subr.mxu0 0.0
    %1893 = vmatpush1.msra.mxu0 0.0
    %1894 = vmatprep.subr.mxu0 0.0
    %1895 = vmatpush1.msra.mxu0 0.0
    %1896 = vmatprep.mubr.f32.mxu0 0.0
    %1897 = vmatmul.mubr.f32.gmra.mrb[0].mxu0 %v1760
    %v1898 = vpop.f32.mrb[0].mxu0
    %v1899 = vadd.f32 %v130, %v1898
    %v1900 = vpop.f32.mrb[0].mxu0
    %1901 = vdwg.mxu0
    %1902 = vmatprep.subr.mxu0 0.0
    %1903 = vmatpush1.msra.mxu0 %v33
    %1904 = vmatprep.subr.mxu0 0.0
    %1905 = vmatpush1.msra.mxu0 %v34
    %1906 = vmatprep.subr.mxu0 0.0
    %1907 = vmatpush1.msra.mxu0 %v35
    %1908 = vmatprep.subr.mxu0 0.0
    %1909 = vmatpush1.msra.mxu0 %v36
    %1910 = vmatprep.subr.mxu0 0.0
    %1911 = vmatpush1.msra.mxu0 0.0
    %1912 = vmatprep.subr.mxu0 0.0
    %1913 = vmatpush1.msra.mxu0 0.0
    %1914 = vmatprep.subr.mxu0 0.0
    %1915 = vmatpush1.msra.mxu0 0.0
    %1916 = vmatprep.subr.mxu0 0.0
    %1917 = vmatpush1.msra.mxu0 0.0
    %1918 = vmatprep.subr.mxu0 0.0
    %1919 = vmatpush1.msra.mxu0 0.0
    %1920 = vmatprep.subr.mxu0 0.0
    %1921 = vmatpush1.msra.mxu0 0.0
    %1922 = vmatprep.subr.mxu0 0.0
    %1923 = vmatpush1.msra.mxu0 0.0
    %1924 = vmatprep.subr.mxu0 0.0
    %1925 = vmatpush1.msra.mxu0 0.0
    %1926 = vmatprep.subr.mxu0 0.0
    %1927 = vmatpush1.msra.mxu0 0.0
    %1928 = vmatprep.subr.mxu0 0.0
    %1929 = vmatpush1.msra.mxu0 0.0
    %1930 = vmatprep.subr.mxu0 0.0
    %1931 = vmatpush1.msra.mxu0 0.0
    %1932 = vmatprep.subr.mxu0 0.0
    %1933 = vmatpush1.msra.mxu0 0.0
    %1934 = vmatprep.subr.mxu0 0.0
    %1935 = vmatpush1.msra.mxu0 0.0
    %1936 = vmatprep.subr.mxu0 0.0
    %1937 = vmatpush1.msra.mxu0 0.0
    %1938 = vmatprep.subr.mxu0 0.0
    %1939 = vmatpush1.msra.mxu0 0.0
    %1940 = vmatprep.subr.mxu0 0.0
    %1941 = vmatpush1.msra.mxu0 0.0
    %1942 = vmatprep.subr.mxu0 0.0
    %1943 = vmatpush1.msra.mxu0 0.0
    %1944 = vmatprep.subr.mxu0 0.0
    %1945 = vmatpush1.msra.mxu0 0.0
    %1946 = vmatprep.subr.mxu0 0.0
    %1947 = vmatpush1.msra.mxu0 0.0
    %1948 = vmatprep.subr.mxu0 0.0
    %1949 = vmatpush1.msra.mxu0 0.0
    %1950 = vmatprep.subr.mxu0 0.0
    %1951 = vmatpush1.msra.mxu0 0.0
    %1952 = vmatprep.subr.mxu0 0.0
    %1953 = vmatpush1.msra.mxu0 0.0
    %1954 = vmatprep.subr.mxu0 0.0
    %1955 = vmatpush1.msra.mxu0 0.0
    %1956 = vmatprep.subr.mxu0 0.0
    %1957 = vmatpush1.msra.mxu0 0.0
    %1958 = vmatprep.subr.mxu0 0.0
    %1959 = vmatpush1.msra.mxu0 0.0
    %1960 = vmatprep.subr.mxu0 0.0
    %1961 = vmatpush1.msra.mxu0 0.0
    %1962 = vmatprep.subr.mxu0 0.0
    %1963 = vmatpush1.msra.mxu0 0.0
    %1964 = vmatprep.subr.mxu0 0.0
    %1965 = vmatpush1.msra.mxu0 0.0
    %1966 = vmatprep.mubr.f32.mxu0 0.0
    %1967 = vmatmul.mubr.f32.gmra.mrb[0].mxu0 %v1760
    %v1968 = vpop.f32.mrb[0].mxu0
    %v1969 = vadd.f32 %v206, %v1968
    %v1970 = vpop.f32.mrb[0].mxu0
    %1971 = vdwg.mxu0
    %v1972 = vadd.f32 %v1756, %v1829
    %v1973 = vxor.u32 %v1972, 2147483648
    %v1974 = vmul.f32 %v1973, 1.442695
    %v1975 = vpow.pop %v1974
    %v1976 = vadd.f32 %v1975, 1.0
    %v1977 = vrcp.pop %v1976
    %v1978 = vmul.f32 1.0, %v1977
    %v1979 = vadd.f32 %v1757, %v1899
    %v1980 = vxor.u32 %v1979, 2147483648
    %v1981 = vmul.f32 %v1980, 1.442695
    %v1982 = vpow.pop %v1981
    %v1983 = vadd.f32 %v1982, 1.0
    %v1984 = vrcp.pop %v1983
    %v1985 = vmul.f32 1.0, %v1984
    %v1986 = vmul.f32 %v1978, %v1969
    %v1987 = vadd.f32 %v1758, %v1986
    %v1988 = vtanh.pop %v1987
    %v1989 = vsub.f32 1.0, %v1985
    %v1990 = vmul.f32 %v1989, %v1988
    %v1991 = vmul.f32 %v1985, %v1754
    %v1992 = vadd.f32 %v1990, %v1991
    %1993 = vst.msk [vmem:[#allocation2] sm:$0xf] %vm299, %v1992
    %s1994 = scalar_lea.vmem %s3, 28
    %1995 = vst.msk [vmem:[%s1994] sm:$0xf] %vm299, %v1992
    // Predicated region
    $region18: #{encoder_forward.1} parent=1 // pred_check
      %p1996 = pneg %p17
    $region19: #{encoder_forward.1} parent=1 // pred_check_branch
      %1998 = sbr.rel (%p1996) target = $region21
    $region20: #{encoder_forward.1} parent=1 // pred_region
      %v1999 = vld [vmem:[#allocation2] sm:$0xf]
      %2000 = vst.msk [vmem:[#allocation3] sm:$0xf] %vm299, %v1999
    $region21: #{encoder_forward.1} parent=1 // pred_fallthru
      _
    // Predicated region
    $region22: #{encoder_forward.1} parent=1 // pred_check
      _
    $region23: #{encoder_forward.1} parent=1 // pred_check_branch
      %2002 = sbr.rel (0) target = $region25
    $region24: #{encoder_forward.1} parent=1 // pred_region
      _
    $region25: #{encoder_forward.1} parent=1 // pred_fallthru
      _
    // Predicated region
    $region26: #{encoder_forward.1} parent=1 // pred_check
      _
    $region27: #{encoder_forward.1} parent=1 // pred_check_branch
      %2004 = sbr.rel (0) target = $region29
    $region28: #{encoder_forward.1} parent=1 // pred_region
      %s2006 = ssub.s32 64, 64
      %2007 = vsyncadd [#allocation4], %s2006
      %s2009 = sshll.u32 [#allocation3], 4
      %s2010 = int_to_ptr.vmem [resolvable:$true] %s2009
      %2012 = dma.vmem_to_hbm [thread:$0]  %s2010, 64, %s4, [#allocation4]
    $region29: #{encoder_forward.1} parent=1 // pred_fallthru
      _
    // Predicated region
    $region30: #{encoder_forward.1} parent=1 // pred_check
      _
    $region31: #{encoder_forward.1} parent=1 // pred_check_branch
      %2014 = sbr.rel (0) target = $region33
    $region32: #{encoder_forward.1} parent=1 // pred_region
      _
    $region33: #{encoder_forward.1} parent=1 // pred_fallthru
      _
    // Predicated region
    $region34: #{encoder_forward.1} parent=1 // pred_check
      _
    $region35: #{encoder_forward.1} parent=1 // pred_check_branch
      %2016 = sbr.rel (0) target = $region37
    $region36: #{encoder_forward.1} parent=1 // pred_region
      %2017 = dma.done [#allocation4], 64
    $region37: #{encoder_forward.1} parent=1 // pred_fallthru
      _
    %2018 = vsyncpa [#allocation4], 1

</llo_original>
